<compile_context>
chip_gen: v5e
topology: v5e:2x2
jax: 0.10.0
libtpu: 0.0.40
codegen_flags: <defaults>
</compile_context>

<pallas_src>
import jax
import jax.numpy as jnp
from jax.experimental import pallas as pl
from jax.experimental.pallas import tpu as pltpu


def _round_up(x, m):
    return ((x + m - 1) // m) * m


def discriminator_kernel(x_ref, w1_ref, b1_ref, w2_ref, b2_ref, w3_ref, b3_ref,
                         o_ref):
    # (TB, 784) activation tile.  Feed the MXU in bf16, accumulate in f32.
    x = x_ref[...]
    if x.dtype != jnp.bfloat16:
        # f32 producer: cast in-kernel (no extra HBM pass).  bf16 producers
        # (generator output / data pipeline) skip this entirely - the big
        # HBM-bandwidth lever on v6e/v7x.
        x = x.astype(jnp.bfloat16)

    # Linear(784 -> 512) + LeakyReLU(0.2); cast to bf16 fused into the
    # activation write (halves h1's footprint before the second matmul).
    h1 = jnp.dot(x, w1_ref[...], preferred_element_type=jnp.float32) + b1_ref[...]
    h1 = jnp.where(h1 > 0, h1, 0.2 * h1).astype(jnp.bfloat16)

    # Dropout(0.5): inference-mode identity.
    # TODO(synk): training-mode stochastic dropout (pltpu.prng_random_bits mask
    # scaled by 1/(1-p)) is omitted; eval semantics are reproduced exactly.

    # Linear(512 -> 256) + LeakyReLU(0.2); elementwise kept in f32 (v5e VPU
    # has no bf16 path).
    h2 = jnp.dot(h1, w2_ref[...], preferred_element_type=jnp.float32) + b2_ref[...]
    h2 = jnp.where(h2 > 0, h2, 0.2 * h2)

    # Linear(256 -> 1) as an XLU lane reduction (keeps the N=1 pass off the
    # MXU); scalar bias from SMEM; Sigmoid on the EUP.
    logits = jnp.sum(h2 * w3_ref[...], axis=-1, keepdims=True) + b3_ref[0, 0]
    o_ref[...] = jax.nn.sigmoid(logits)


def _pick_tile(B, tb):
    """Batch tile: large enough to amortize per-grid-step overhead, but clamped
    so batches > 256 rows always produce >= 2 grid steps (both v7x TCs busy)."""
    b8 = _round_up(B, 8)                 # sublane multiple for the (8,128) rule
    if b8 <= 256:
        return b8                        # tiny batch: one small tile
    return min(tb, _round_up(pl.cdiv(b8, 2), 256))


def discriminator_forward(img, params, *, tb=1024):
    """img: (B, 784) float32 or bfloat16.  Returns (B, 1) float32 probabilities."""
    w1, b1, w2, b2, w3, b3 = params
    B, D = img.shape

    TB = _pick_tile(B, tb)
    # Ragged last block (when TB does not divide B) is clipped by Pallas on
    # both the input read and the output writeback -> no padded copy of img.
    grid = (pl.cdiv(B, TB),)

    flops = 2 * B * (D * 512 + 512 * 256 + 256)
    bytes_accessed = (img.size * img.dtype.itemsize
                      + w1.size * 2 + w2.size * 2
                      + (b1.size + b2.size + w3.size + b3.size) * 4
                      + B * 4)
    cost = pl.CostEstimate(flops=flops, transcendentals=B,
                           bytes_accessed=bytes_accessed)

    out = pl.pallas_call(
        discriminator_kernel,
        out_shape=jax.ShapeDtypeStruct((B, 1), jnp.float32),
        grid=grid,
        in_specs=[
            pl.BlockSpec((TB, D), lambda i: (i, 0)),            # activation tile
            pl.BlockSpec(w1.shape, lambda i: (0, 0)),           # VMEM-resident weights
            pl.BlockSpec(b1.shape, lambda i: (0, 0)),
            pl.BlockSpec(w2.shape, lambda i: (0, 0)),
            pl.BlockSpec(b2.shape, lambda i: (0, 0)),
            pl.BlockSpec(w3.shape, lambda i: (0, 0)),
            pl.BlockSpec(memory_space=pltpu.MemorySpace.SMEM),  # b3 scalar
        ],
        out_specs=pl.BlockSpec((TB, 1), lambda i: (i, 0)),
        compiler_params=pltpu.CompilerParams(
            dimension_semantics=("parallel",),
            vmem_limit_bytes=32 * 1024 * 1024,
        ),
        cost_estimate=cost,
    )(img, w1, b1, w2, b2, w3, b3)

    return out


def init_params(key, input_dim=784):
    """Deterministic init mimicking PyTorch nn.Linear default U(-1/sqrt(fan_in), +).

    Layout: w stored (in_features, out_features) so the kernel computes x @ W + b.
    w1/w2 are stored bf16 (HBM-traffic / MXU-rate win); w3 is a (1, 256) f32 row
    used by the lane reduction; biases f32; b3 is a (1, 1) f32 scalar for SMEM.
    """
    dims = [(input_dim, 512), (512, 256), (256, 1)]
    raw = []
    for fan_in, fan_out in dims:
        kw, kb, key = jax.random.split(key, 3)
        bound = 1.0 / jnp.sqrt(fan_in)
        w = jax.random.uniform(kw, (fan_in, fan_out), jnp.float32, -bound, bound)
        b = jax.random.uniform(kb, (1, fan_out), jnp.float32, -bound, bound)
        raw += [w, b]
    w1, b1, w2, b2, w3, b3 = raw
    return (w1.astype(jnp.bfloat16), b1,
            w2.astype(jnp.bfloat16), b2,
            w3.reshape(1, 256), b3.reshape(1, 1))


def reference_forward(img, params):
    """Pure-JAX reference following the same bf16-weight / f32-accumulate path."""
    w1, b1, w2, b2, w3, b3 = params
    h = jnp.dot(img.astype(jnp.bfloat16), w1,
                preferred_element_type=jnp.float32) + b1
    h = jnp.where(h > 0, h, 0.2 * h)
    h = jnp.dot(h.astype(jnp.bfloat16), w2,
                preferred_element_type=jnp.float32) + b2
    h = jnp.where(h > 0, h, 0.2 * h)
    logits = jnp.sum(h * w3, axis=-1, keepdims=True) + b3[0, 0]
    return jax.nn.sigmoid(logits)


if __name__ == "__main__":
    key = jax.random.PRNGKey(0)
    k_img, k_par = jax.random.split(key)

    input_dim = 784
    params = init_params(k_par, input_dim)

    # Small single-tile batch.
    img_s = jax.random.normal(k_img, (8, input_dim), dtype=jnp.float32)
    out_s = jax.block_until_ready(discriminator_forward(img_s, params))
    ref_s = reference_forward(img_s, params)
    assert out_s.shape == (8, 1)
    assert jnp.allclose(out_s, ref_s, atol=2e-3, rtol=2e-3), "mismatch (B=8)"

    # Misaligned batch: multi-step grid + ragged last block, no padding copy.
    img_m = jax.random.normal(k_img, (300, input_dim), dtype=jnp.float32)
    out_m = jax.block_until_ready(discriminator_forward(img_m, params))
    ref_m = reference_forward(img_m, params)
    assert out_m.shape == (300, 1)
    assert jnp.allclose(out_m, ref_m, atol=2e-3, rtol=2e-3), "mismatch (B=300)"

    # bf16-producer path (v6e/v7x HBM lever): no in-kernel f32->bf16 cast.
    img_b = img_m.astype(jnp.bfloat16)
    out_b = jax.block_until_ready(discriminator_forward(img_b, params))
    ref_b = reference_forward(img_b, params)
    assert out_b.shape == (300, 1)
    assert jnp.allclose(out_b, ref_b, atol=2e-3, rtol=2e-3), "mismatch (bf16 input)"

    # Larger batch exercising the TB=1024, two-tile "parallel" configuration.
    img_l = jax.random.normal(k_img, (2048, input_dim), dtype=jnp.float32)
    out_l = jax.block_until_ready(discriminator_forward(img_l, params))
    ref_l = reference_forward(img_l, params)
    assert out_l.shape == (2048, 1)
    assert jnp.allclose(out_l, ref_l, atol=2e-3, rtol=2e-3), "mismatch (B=2048)"

    print("KERNEL_OK")
</pallas_src>

<mosaic_0001>
module attributes {stable_mosaic.version = 11 : i64} {
  func.func @discriminator_kernel(%arg0: i32, %arg1: memref<8x784xf32, #tpu.memory_space<vmem>>, %arg2: memref<784x512xbf16, #tpu.memory_space<vmem>>, %arg3: memref<1x512xf32, #tpu.memory_space<vmem>>, %arg4: memref<512x256xbf16, #tpu.memory_space<vmem>>, %arg5: memref<1x256xf32, #tpu.memory_space<vmem>>, %arg6: memref<1x256xf32, #tpu.memory_space<vmem>>, %arg7: memref<1x1xf32, #tpu.memory_space<smem>>, %arg8: memref<8x1xf32, #tpu.memory_space<vmem>>) attributes {dimension_semantics = [#tpu.dimension_semantics<parallel>], iteration_bounds = array<i64: 1>, scalar_prefetch = 0 : i64, scratch_operands = 0 : i64, tpu.core_type = #tpu.core_type<tc>, window_params = [{transform_indices = @transform_0, window_bounds = array<i64: 8, 784>}, {pipeline_mode = #tpu.pipeline_mode<synchronous>, transform_indices = @transform_1, window_bounds = array<i64: 784, 512>}, {pipeline_mode = #tpu.pipeline_mode<synchronous>, transform_indices = @transform_2, window_bounds = array<i64: 1, 512>}, {pipeline_mode = #tpu.pipeline_mode<synchronous>, transform_indices = @transform_3, window_bounds = array<i64: 512, 256>}, {pipeline_mode = #tpu.pipeline_mode<synchronous>, transform_indices = @transform_4, window_bounds = array<i64: 1, 256>}, {pipeline_mode = #tpu.pipeline_mode<synchronous>, transform_indices = @transform_5, window_bounds = array<i64: 1, 256>}, {transform_indices = @transform_6, window_bounds = array<i64: 1, 1>}, {transform_indices = @transform_7, window_bounds = array<i64: 8, 1>}]} {
    %c0 = arith.constant 0 : index
    %c0_0 = arith.constant 0 : index
    %0 = vector.load %arg1[%c0, %c0_0] : memref<8x784xf32, #tpu.memory_space<vmem>>, vector<8x784xf32>
    %1 = arith.truncf %0 : vector<8x784xf32> to vector<8x784xbf16>
    %c0_1 = arith.constant 0 : index
    %c0_2 = arith.constant 0 : index
    %2 = vector.load %arg2[%c0_1, %c0_2] : memref<784x512xbf16, #tpu.memory_space<vmem>>, vector<784x512xbf16>
    %cst = arith.constant dense<0.000000e+00> : vector<8x512xf32>
    %3 = tpu.matmul %1, %2, %cst {dimension_numbers = #tpu.dot_dimension_numbers<[1], [0], [0], [1], [0, 0, 1, 1], [], []>} : vector<8x784xbf16>, vector<784x512xbf16>, vector<8x512xf32> -> vector<8x512xf32>
    %c0_3 = arith.constant 0 : index
    %c0_4 = arith.constant 0 : index
    %4 = vector.load %arg3[%c0_3, %c0_4] : memref<1x512xf32, #tpu.memory_space<vmem>>, vector<1x512xf32>
    %5 = vector.broadcast %4 : vector<1x512xf32> to vector<8x512xf32>
    %6 = arith.addf %3, %5 : vector<8x512xf32>
    %cst_5 = arith.constant 0.000000e+00 : f32
    %7 = vector.broadcast %cst_5 : f32 to vector<8x512xf32>
    %8 = arith.cmpf ogt, %6, %7 : vector<8x512xf32>
    %cst_6 = arith.constant 2.000000e-01 : f32
    %9 = vector.broadcast %cst_6 : f32 to vector<8x512xf32>
    %10 = arith.mulf %9, %6 : vector<8x512xf32>
    %11 = arith.select %8, %6, %10 : vector<8x512xi1>, vector<8x512xf32>
    %12 = arith.truncf %11 : vector<8x512xf32> to vector<8x512xbf16>
    %c0_7 = arith.constant 0 : index
    %c0_8 = arith.constant 0 : index
    %13 = vector.load %arg4[%c0_7, %c0_8] : memref<512x256xbf16, #tpu.memory_space<vmem>>, vector<512x256xbf16>
    %cst_9 = arith.constant dense<0.000000e+00> : vector<8x256xf32>
    %14 = tpu.matmul %12, %13, %cst_9 {dimension_numbers = #tpu.dot_dimension_numbers<[1], [0], [0], [1], [0, 0, 1, 1], [], []>} : vector<8x512xbf16>, vector<512x256xbf16>, vector<8x256xf32> -> vector<8x256xf32>
    %c0_10 = arith.constant 0 : index
    %c0_11 = arith.constant 0 : index
    %15 = vector.load %arg5[%c0_10, %c0_11] : memref<1x256xf32, #tpu.memory_space<vmem>>, vector<1x256xf32>
    %16 = vector.broadcast %15 : vector<1x256xf32> to vector<8x256xf32>
    %17 = arith.addf %14, %16 : vector<8x256xf32>
    %cst_12 = arith.constant 0.000000e+00 : f32
    %18 = vector.broadcast %cst_12 : f32 to vector<8x256xf32>
    %19 = arith.cmpf ogt, %17, %18 : vector<8x256xf32>
    %cst_13 = arith.constant 2.000000e-01 : f32
    %20 = vector.broadcast %cst_13 : f32 to vector<8x256xf32>
    %21 = arith.mulf %20, %17 : vector<8x256xf32>
    %22 = arith.select %19, %17, %21 : vector<8x256xi1>, vector<8x256xf32>
    %c0_14 = arith.constant 0 : index
    %c0_15 = arith.constant 0 : index
    %23 = vector.load %arg6[%c0_14, %c0_15] : memref<1x256xf32, #tpu.memory_space<vmem>>, vector<1x256xf32>
    %24 = vector.broadcast %23 : vector<1x256xf32> to vector<8x256xf32>
    %25 = arith.mulf %22, %24 : vector<8x256xf32>
    %cst_16 = arith.constant dense<0.000000e+00> : vector<8xf32>
    %26 = vector.multi_reduction <add>, %25, %cst_16 [1] : vector<8x256xf32> to vector<8xf32>
    %27 = vector.shape_cast %26 : vector<8xf32> to vector<8x1xf32>
    %c0_17 = arith.constant 0 : index
    %c0_18 = arith.constant 0 : index
    %28 = memref.load %arg7[%c0_17, %c0_18] : memref<1x1xf32, #tpu.memory_space<smem>>
    %29 = vector.broadcast %28 : f32 to vector<8x1xf32>
    %30 = arith.addf %27, %29 : vector<8x1xf32>
    %31 = arith.negf %30 : vector<8x1xf32>
    %32 = math.exp %31 : vector<8x1xf32>
    %cst_19 = arith.constant 1.000000e+00 : f32
    %33 = vector.broadcast %cst_19 : f32 to vector<8x1xf32>
    %34 = arith.addf %33, %32 : vector<8x1xf32>
    %35 = arith.divf %33, %34 : vector<8x1xf32>
    %c0_20 = arith.constant 0 : index
    %c0_21 = arith.constant 0 : index
    %36 = vector.load %arg8[%c0_20, %c0_21] : memref<8x1xf32, #tpu.memory_space<vmem>>, vector<8x1xf32>
    tpu.vector_store %arg8[%c0_20, %c0_21], %35 {strides = array<i32>} : memref<8x1xf32, #tpu.memory_space<vmem>>, vector<8x1xf32>,
    return
  }
  func.func @transform_0(%arg0: i32) -> (i32, i32) {
    %c0_i32 = arith.constant 0 : i32
    %c0_i32_0 = arith.constant 0 : i32
    return %arg0, %c0_i32 : i32, i32
  }
  func.func @transform_1(%arg0: i32) -> (i32, i32) {
    %c0_i32 = arith.constant 0 : i32
    %c0_i32_0 = arith.constant 0 : i32
    %c0_i32_1 = arith.constant 0 : i32
    return %c0_i32, %c0_i32_0 : i32, i32
  }
  func.func @transform_2(%arg0: i32) -> (i32, i32) {
    %c0_i32 = arith.constant 0 : i32
    %c0_i32_0 = arith.constant 0 : i32
    %c0_i32_1 = arith.constant 0 : i32
    return %c0_i32, %c0_i32_0 : i32, i32
  }
  func.func @transform_3(%arg0: i32) -> (i32, i32) {
    %c0_i32 = arith.constant 0 : i32
    %c0_i32_0 = arith.constant 0 : i32
    %c0_i32_1 = arith.constant 0 : i32
    return %c0_i32, %c0_i32_0 : i32, i32
  }
  func.func @transform_4(%arg0: i32) -> (i32, i32) {
    %c0_i32 = arith.constant 0 : i32
    %c0_i32_0 = arith.constant 0 : i32
    %c0_i32_1 = arith.constant 0 : i32
    return %c0_i32, %c0_i32_0 : i32, i32
  }
  func.func @transform_5(%arg0: i32) -> (i32, i32) {
    %c0_i32 = arith.constant 0 : i32
    %c0_i32_0 = arith.constant 0 : i32
    %c0_i32_1 = arith.constant 0 : i32
    return %c0_i32, %c0_i32_0 : i32, i32
  }
  func.func @transform_6(%arg0: i32) -> (i32, i32) {
    %c0_i32 = arith.constant 0 : i32
    %c0_i32_0 = arith.constant 0 : i32
    %c0_i32_1 = arith.constant 0 : i32
    return %c0_i32, %c0_i32_0 : i32, i32
  }
  func.func @transform_7(%arg0: i32) -> (i32, i32) {
    %c0_i32 = arith.constant 0 : i32
    %c0_i32_0 = arith.constant 0 : i32
    return %arg0, %c0_i32 : i32, i32
  }
}

</mosaic_0001>

<llo_original>
// kernel: tpu_custom_call.1
$region0: #{tpu_custom_call.1}
  #allocation0 [shape = 'u32[]', space=smem, size = 0x4, offset = 0x4, fixed_abs, tag = 'smem constant byte address 0x4 - core index']
  #allocation1 [shape = 'u32[72,128]{1,0:T(1,128)}', space=vmem, size = 0x9000, scoped, tag = 'internal scratch']
  #allocation2 [shape = 'f32[1,1]{1,0:T(1,128)S(6)}', space=smem, size = 0x200, scoped, tag = 'scoped memory for tpu_custom_call.1']
  %s0 = inlined_call_operand.hbm [shape: f32[8,784], index: 0, kind: input, shape index: {}]
  %s1 = inlined_call_operand.hbm [shape: bf16[784,512], index: 1, kind: input, shape index: {}]
  %s2 = inlined_call_operand.hbm [shape: f32[1,512], index: 2, kind: input, shape index: {}]
  %s3 = inlined_call_operand.hbm [shape: bf16[512,256], index: 3, kind: input, shape index: {}]
  %s4 = inlined_call_operand.vmem [shape: f32[1,256], index: 4, kind: input, shape index: {}]
  %s5 = inlined_call_operand.vmem [shape: f32[1,256], index: 5, kind: input, shape index: {}]
  %s6 = inlined_call_operand.<no memory space> [shape: f32[1,1], index: 6, kind: input, shape index: {}]
  %s7 = inlined_call_operand.vmem [shape: f32[8,1], index: 7, kind: output, shape index: {}]
  %s8 = sld [smem:[#allocation0]]
  $region54: #{tpu_custom_call.1} parent=0
    _
  %s10 = ssub.s32 1, %s8
  %s11 = scalar_select 0, %s10, %s8
  %12 = sst [smem:[#allocation2]] %s6
  $region1: #{tpu_custom_call.1} parent=0
    #allocation3 [shape = 'u8[28672]{0}', space=vmem, size = 0x7000, scoped, tag = 'input window, operand 0, single buffered']
    #allocation4 [shape = 's32[1]{0}', space=sflag, size = 0x4, scoped, tag = 'scoped memory for tpu_custom_call.1']
    #allocation5 [shape = 'u8[802816]{0}', space=vmem, size = 0xc4000, scoped, tag = 'input window, operand 1, single buffered']
    #allocation6 [shape = 's32[1]{0}', space=sflag, size = 0x4, scoped, tag = 'scoped memory for tpu_custom_call.1']
    #allocation7 [shape = 'u8[2048]{0}', space=vmem, size = 0x800, scoped, tag = 'input window, operand 2, single buffered']
    #allocation8 [shape = 'u8[262144]{0}', space=vmem, size = 0x40000, scoped, tag = 'input window, operand 3, single buffered']
    #allocation9 [shape = 's32[1]{0}', space=sflag, size = 0x4, scoped, tag = 'scoped memory for tpu_custom_call.1']
    %13 = vsyncpa [#allocation4], 0
    %14 = vsyncpa [#allocation6], 0
    %15 = vsyncpa [#allocation9], 0
    // Predicated region
    $region2: #{tpu_custom_call.1} parent=1 // pred_check
      _
    $region3: #{tpu_custom_call.1} parent=1 // pred_check_branch
      %17 = sbr.rel (0) target = $region5
    $region4: #{tpu_custom_call.1} parent=1 // pred_region
      %19 = vsyncadd [#allocation4], 0
      %s21 = sshll.u32 %s0, 4
      %s22 = int_to_ptr.hbm [resolvable:$true] %s21
      %s23 = sshll.u32 [#allocation3], 4
      %s24 = int_to_ptr.vmem [resolvable:$true] %s23
      %26 = dma.hbm_to_vmem [thread:$0]  %s22, 896, %s24, [#allocation4]
    $region5: #{tpu_custom_call.1} parent=1 // pred_fallthru
      _
    // Predicated region
    $region6: #{tpu_custom_call.1} parent=1 // pred_check
      _
    $region7: #{tpu_custom_call.1} parent=1 // pred_check_branch
      %28 = sbr.rel (0) target = $region9
    $region8: #{tpu_custom_call.1} parent=1 // pred_region
      %30 = vsyncadd [#allocation6], 0
      %s31 = sshll.u32 %s1, 4
      %s32 = int_to_ptr.hbm [resolvable:$true] %s31
      %s33 = sshll.u32 [#allocation5], 4
      %s34 = int_to_ptr.vmem [resolvable:$true] %s33
      %39 = dma.hbm_to_vmem [thread:$0]  %s32, 25088, %s34, [#allocation6], 256, 256, 16
    $region9: #{tpu_custom_call.1} parent=1 // pred_fallthru
      _
    // Predicated region
    $region10: #{tpu_custom_call.1} parent=1 // pred_check
      _
    $region11: #{tpu_custom_call.1} parent=1 // pred_check_branch
      %41 = sbr.rel (0) target = $region13
    $region12: #{tpu_custom_call.1} parent=1 // pred_region
      %43 = vsyncadd [#allocation6], 0
      %s45 = sshll.u32 %s2, 4
      %s46 = int_to_ptr.hbm [resolvable:$true] %s45
      %s47 = sshll.u32 [#allocation7], 4
      %s48 = int_to_ptr.vmem [resolvable:$true] %s47
      %50 = dma.hbm_to_vmem [thread:$0]  %s46, 64, %s48, [#allocation6]
    $region13: #{tpu_custom_call.1} parent=1 // pred_fallthru
      _
    // Predicated region
    $region14: #{tpu_custom_call.1} parent=1 // pred_check
      _
    $region15: #{tpu_custom_call.1} parent=1 // pred_check_branch
      %52 = sbr.rel (0) target = $region17
    $region16: #{tpu_custom_call.1} parent=1 // pred_region
      %54 = vsyncadd [#allocation9], 0
      %s55 = sshll.u32 %s3, 4
      %s56 = int_to_ptr.hbm [resolvable:$true] %s55
      %s57 = sshll.u32 [#allocation8], 4
      %s58 = int_to_ptr.vmem [resolvable:$true] %s57
      %63 = dma.hbm_to_vmem [thread:$0]  %s56, 8192, %s58, [#allocation9], 128, 128, 8
    $region17: #{tpu_custom_call.1} parent=1 // pred_fallthru
      _
    // Predicated region
    $region18: #{tpu_custom_call.1} parent=1 // pred_check
      _
    $region19: #{tpu_custom_call.1} parent=1 // pred_check_branch
      %65 = sbr.rel (0) target = $region21
    $region20: #{tpu_custom_call.1} parent=1 // pred_region
      _
    $region21: #{tpu_custom_call.1} parent=1 // pred_fallthru
      _
    // Predicated region
    $region22: #{tpu_custom_call.1} parent=1 // pred_check
      _
    $region23: #{tpu_custom_call.1} parent=1 // pred_check_branch
      %67 = sbr.rel (0) target = $region25
    $region24: #{tpu_custom_call.1} parent=1 // pred_region
      _
    $region25: #{tpu_custom_call.1} parent=1 // pred_fallthru
      _
    // Predicated region
    $region26: #{tpu_custom_call.1} parent=1 // pred_check
      _
    $region27: #{tpu_custom_call.1} parent=1 // pred_check_branch
      %69 = sbr.rel (0) target = $region29
    $region28: #{tpu_custom_call.1} parent=1 // pred_region
      _
    $region29: #{tpu_custom_call.1} parent=1 // pred_fallthru
      _
    // Predicated region
    $region30: #{tpu_custom_call.1} parent=1 // pred_check
      _
    $region31: #{tpu_custom_call.1} parent=1 // pred_check_branch
      %71 = sbr.rel (0) target = $region33
    $region32: #{tpu_custom_call.1} parent=1 // pred_region
      %73 = dma.done [#allocation4], 896
    $region33: #{tpu_custom_call.1} parent=1 // pred_fallthru
      _
    // Predicated region
    $region34: #{tpu_custom_call.1} parent=1 // pred_check
      _
    $region35: #{tpu_custom_call.1} parent=1 // pred_check_branch
      %75 = sbr.rel (0) target = $region37
    $region36: #{tpu_custom_call.1} parent=1 // pred_region
      %77 = dma.done [#allocation6], 25088
    $region37: #{tpu_custom_call.1} parent=1 // pred_fallthru
      _
    // Predicated region
    $region38: #{tpu_custom_call.1} parent=1 // pred_check
      _
    $region39: #{tpu_custom_call.1} parent=1 // pred_check_branch
      %79 = sbr.rel (0) target = $region41
    $region40: #{tpu_custom_call.1} parent=1 // pred_region
      %81 = dma.done [#allocation6], 64
    $region41: #{tpu_custom_call.1} parent=1 // pred_fallthru
      _
    // Predicated region
    $region42: #{tpu_custom_call.1} parent=1 // pred_check
      _
    $region43: #{tpu_custom_call.1} parent=1 // pred_check_branch
      %83 = sbr.rel (0) target = $region45
    $region44: #{tpu_custom_call.1} parent=1 // pred_region
      %85 = dma.done [#allocation9], 8192
    $region45: #{tpu_custom_call.1} parent=1 // pred_fallthru
      _
    %v87 = vld [vmem:[#allocation3] sm:$0xff]
    %v88 = vld [vmem:[#allocation3 + $0x8] sm:$0xff]
    %v89 = vld [vmem:[#allocation3 + $0x10] sm:$0xff]
    %v90 = vld [vmem:[#allocation3 + $0x18] sm:$0xff]
    %v91 = vld [vmem:[#allocation3 + $0x20] sm:$0xff]
    %v92 = vld [vmem:[#allocation3 + $0x28] sm:$0xff]
    %v93 = vld [vmem:[#allocation3 + $0x30] sm:$0xff]
    %v94 = vpack.c.bf16 %v87, %v87
    %v95 = vpack.c.bf16 %v88, %v88
    %v96 = vpack.c.bf16 %v89, %v89
    %v97 = vpack.c.bf16 %v90, %v90
    %v98 = vpack.c.bf16 %v91, %v91
    %v99 = vpack.c.bf16 %v92, %v92
    %v100 = vpack.c.bf16 %v93, %v93
    %v101 = vld [vmem:[#allocation5] sm:$0xff]
    %v102 = vld [vmem:[#allocation5 + $0x8] sm:$0xff]
    %v103 = vld [vmem:[#allocation5 + $0x10] sm:$0xff]
    %v104 = vld [vmem:[#allocation5 + $0x18] sm:$0xff]
    %v105 = vld [vmem:[#allocation5 + $0x20] sm:$0xff]
    %v106 = vld [vmem:[#allocation5 + $0x28] sm:$0xff]
    %v107 = vld [vmem:[#allocation5 + $0x30] sm:$0xff]
    %v108 = vld [vmem:[#allocation5 + $0x38] sm:$0xff]
    %v109 = vld [vmem:[#allocation5 + $0x40] sm:$0xff]
    %v110 = vld [vmem:[#allocation5 + $0x48] sm:$0xff]
    %v111 = vld [vmem:[#allocation5 + $0x50] sm:$0xff]
    %v112 = vld [vmem:[#allocation5 + $0x58] sm:$0xff]
    %v113 = vld [vmem:[#allocation5 + $0x60] sm:$0xff]
    %v114 = vld [vmem:[#allocation5 + $0x68] sm:$0xff]
    %v115 = vld [vmem:[#allocation5 + $0x70] sm:$0xff]
    %v116 = vld [vmem:[#allocation5 + $0x78] sm:$0xff]
    %v117 = vld [vmem:[#allocation5 + $0x80] sm:$0xff]
    %v118 = vld [vmem:[#allocation5 + $0x88] sm:$0xff]
    %v119 = vld [vmem:[#allocation5 + $0x90] sm:$0xff]
    %v120 = vld [vmem:[#allocation5 + $0x98] sm:$0xff]
    %v121 = vld [vmem:[#allocation5 + $0xa0] sm:$0xff]
    %v122 = vld [vmem:[#allocation5 + $0xa8] sm:$0xff]
    %v123 = vld [vmem:[#allocation5 + $0xb0] sm:$0xff]
    %v124 = vld [vmem:[#allocation5 + $0xb8] sm:$0xff]
    %v125 = vld [vmem:[#allocation5 + $0xc0] sm:$0xff]
    %v126 = vld [vmem:[#allocation5 + $0xc8] sm:$0xff]
    %v127 = vld [vmem:[#allocation5 + $0xd0] sm:$0xff]
    %v128 = vld [vmem:[#allocation5 + $0xd8] sm:$0xff]
    %v129 = vld [vmem:[#allocation5 + $0xe0] sm:$0xff]
    %v130 = vld [vmem:[#allocation5 + $0xe8] sm:$0xff]
    %v131 = vld [vmem:[#allocation5 + $0xf0] sm:$0xff]
    %v132 = vld [vmem:[#allocation5 + $0xf8] sm:$0xff]
    %v133 = vld [vmem:[#allocation5 + $0x100] sm:$0xff]
    %v134 = vld [vmem:[#allocation5 + $0x108] sm:$0xff]
    %v135 = vld [vmem:[#allocation5 + $0x110] sm:$0xff]
    %v136 = vld [vmem:[#allocation5 + $0x118] sm:$0xff]
    %v137 = vld [vmem:[#allocation5 + $0x120] sm:$0xff]
    %v138 = vld [vmem:[#allocation5 + $0x128] sm:$0xff]
    %v139 = vld [vmem:[#allocation5 + $0x130] sm:$0xff]
    %v140 = vld [vmem:[#allocation5 + $0x138] sm:$0xff]
    %v141 = vld [vmem:[#allocation5 + $0x140] sm:$0xff]
    %v142 = vld [vmem:[#allocation5 + $0x148] sm:$0xff]
    %v143 = vld [vmem:[#allocation5 + $0x150] sm:$0xff]
    %v144 = vld [vmem:[#allocation5 + $0x158] sm:$0xff]
    %v145 = vld [vmem:[#allocation5 + $0x160] sm:$0xff]
    %v146 = vld [vmem:[#allocation5 + $0x168] sm:$0xff]
    %v147 = vld [vmem:[#allocation5 + $0x170] sm:$0xff]
    %v148 = vld [vmem:[#allocation5 + $0x178] sm:$0xff]
    %v149 = vld [vmem:[#allocation5 + $0x180] sm:$0xff]
    %v150 = vld [vmem:[#allocation5 + $0x188] sm:$0xff]
    %v151 = vld [vmem:[#allocation5 + $0x190] sm:$0xff]
    %v152 = vld [vmem:[#allocation5 + $0x198] sm:$0xff]
    %v153 = vld [vmem:[#allocation5 + $0x1a0] sm:$0xff]
    %v154 = vld [vmem:[#allocation5 + $0x1a8] sm:$0xff]
    %v155 = vld [vmem:[#allocation5 + $0x1b0] sm:$0xff]
    %v156 = vld [vmem:[#allocation5 + $0x1b8] sm:$0xff]
    %v157 = vld [vmem:[#allocation5 + $0x1c0] sm:$0xff]
    %v158 = vld [vmem:[#allocation5 + $0x1c8] sm:$0xff]
    %v159 = vld [vmem:[#allocation5 + $0x1d0] sm:$0xff]
    %v160 = vld [vmem:[#allocation5 + $0x1d8] sm:$0xff]
    %v161 = vld [vmem:[#allocation5 + $0x1e0] sm:$0xff]
    %v162 = vld [vmem:[#allocation5 + $0x1e8] sm:$0xff]
    %v163 = vld [vmem:[#allocation5 + $0x1f0] sm:$0xff]
    %v164 = vld [vmem:[#allocation5 + $0x1f8] sm:$0xff]
    %v165 = vld [vmem:[#allocation5 + $0x200] sm:$0xff]
    %v166 = vld [vmem:[#allocation5 + $0x208] sm:$0xff]
    %v167 = vld [vmem:[#allocation5 + $0x210] sm:$0xff]
    %v168 = vld [vmem:[#allocation5 + $0x218] sm:$0xff]
    %v169 = vld [vmem:[#allocation5 + $0x220] sm:$0xff]
    %v170 = vld [vmem:[#allocation5 + $0x228] sm:$0xff]
    %v171 = vld [vmem:[#allocation5 + $0x230] sm:$0xff]
    %v172 = vld [vmem:[#allocation5 + $0x238] sm:$0xff]
    %v173 = vld [vmem:[#allocation5 + $0x240] sm:$0xff]
    %v174 = vld [vmem:[#allocation5 + $0x248] sm:$0xff]
    %v175 = vld [vmem:[#allocation5 + $0x250] sm:$0xff]
    %v176 = vld [vmem:[#allocation5 + $0x258] sm:$0xff]
    %v177 = vld [vmem:[#allocation5 + $0x260] sm:$0xff]
    %v178 = vld [vmem:[#allocation5 + $0x268] sm:$0xff]
    %v179 = vld [vmem:[#allocation5 + $0x270] sm:$0xff]
    %v180 = vld [vmem:[#allocation5 + $0x278] sm:$0xff]
    %v181 = vld [vmem:[#allocation5 + $0x280] sm:$0xff]
    %v182 = vld [vmem:[#allocation5 + $0x288] sm:$0xff]
    %v183 = vld [vmem:[#allocation5 + $0x290] sm:$0xff]
    %v184 = vld [vmem:[#allocation5 + $0x298] sm:$0xff]
    %v185 = vld [vmem:[#allocation5 + $0x2a0] sm:$0xff]
    %v186 = vld [vmem:[#allocation5 + $0x2a8] sm:$0xff]
    %v187 = vld [vmem:[#allocation5 + $0x2b0] sm:$0xff]
    %v188 = vld [vmem:[#allocation5 + $0x2b8] sm:$0xff]
    %v189 = vld [vmem:[#allocation5 + $0x2c0] sm:$0xff]
    %v190 = vld [vmem:[#allocation5 + $0x2c8] sm:$0xff]
    %v191 = vld [vmem:[#allocation5 + $0x2d0] sm:$0xff]
    %v192 = vld [vmem:[#allocation5 + $0x2d8] sm:$0xff]
    %v193 = vld [vmem:[#allocation5 + $0x2e0] sm:$0xff]
    %v194 = vld [vmem:[#allocation5 + $0x2e8] sm:$0xff]
    %v195 = vld [vmem:[#allocation5 + $0x2f0] sm:$0xff]
    %v196 = vld [vmem:[#allocation5 + $0x2f8] sm:$0xff]
    %v197 = vld [vmem:[#allocation5 + $0x300] sm:$0xff]
    %v198 = vld [vmem:[#allocation5 + $0x308] sm:$0xff]
    %v199 = vld [vmem:[#allocation5 + $0x310] sm:$0xff]
    %v200 = vld [vmem:[#allocation5 + $0x318] sm:$0xff]
    %v201 = vld [vmem:[#allocation5 + $0x320] sm:$0xff]
    %v202 = vld [vmem:[#allocation5 + $0x328] sm:$0xff]
    %v203 = vld [vmem:[#allocation5 + $0x330] sm:$0xff]
    %v204 = vld [vmem:[#allocation5 + $0x338] sm:$0xff]
    %v205 = vld [vmem:[#allocation5 + $0x340] sm:$0xff]
    %v206 = vld [vmem:[#allocation5 + $0x348] sm:$0xff]
    %v207 = vld [vmem:[#allocation5 + $0x350] sm:$0xff]
    %v208 = vld [vmem:[#allocation5 + $0x358] sm:$0xff]
    %v209 = vld [vmem:[#allocation5 + $0x360] sm:$0xff]
    %v210 = vld [vmem:[#allocation5 + $0x368] sm:$0xff]
    %v211 = vld [vmem:[#allocation5 + $0x370] sm:$0xff]
    %v212 = vld [vmem:[#allocation5 + $0x378] sm:$0xff]
    %v213 = vld [vmem:[#allocation5 + $0x380] sm:$0xff]
    %v214 = vld [vmem:[#allocation5 + $0x388] sm:$0xff]
    %v215 = vld [vmem:[#allocation5 + $0x390] sm:$0xff]
    %v216 = vld [vmem:[#allocation5 + $0x398] sm:$0xff]
    %v217 = vld [vmem:[#allocation5 + $0x3a0] sm:$0xff]
    %v218 = vld [vmem:[#allocation5 + $0x3a8] sm:$0xff]
    %v219 = vld [vmem:[#allocation5 + $0x3b0] sm:$0xff]
    %v220 = vld [vmem:[#allocation5 + $0x3b8] sm:$0xff]
    %v221 = vld [vmem:[#allocation5 + $0x3c0] sm:$0xff]
    %v222 = vld [vmem:[#allocation5 + $0x3c8] sm:$0xff]
    %v223 = vld [vmem:[#allocation5 + $0x3d0] sm:$0xff]
    %v224 = vld [vmem:[#allocation5 + $0x3d8] sm:$0xff]
    %v225 = vld [vmem:[#allocation5 + $0x3e0] sm:$0xff]
    %v226 = vld [vmem:[#allocation5 + $0x3e8] sm:$0xff]
    %v227 = vld [vmem:[#allocation5 + $0x3f0] sm:$0xff]
    %v228 = vld [vmem:[#allocation5 + $0x3f8] sm:$0xff]
    %v229 = vld [vmem:[#allocation5 + $0x400] sm:$0xff]
    %v230 = vld [vmem:[#allocation5 + $0x408] sm:$0xff]
    %v231 = vld [vmem:[#allocation5 + $0x410] sm:$0xff]
    %v232 = vld [vmem:[#allocation5 + $0x418] sm:$0xff]
    %v233 = vld [vmem:[#allocation5 + $0x420] sm:$0xff]
    %v234 = vld [vmem:[#allocation5 + $0x428] sm:$0xff]
    %v235 = vld [vmem:[#allocation5 + $0x430] sm:$0xff]
    %v236 = vld [vmem:[#allocation5 + $0x438] sm:$0xff]
    %v237 = vld [vmem:[#allocation5 + $0x440] sm:$0xff]
    %v238 = vld [vmem:[#allocation5 + $0x448] sm:$0xff]
    %v239 = vld [vmem:[#allocation5 + $0x450] sm:$0xff]
    %v240 = vld [vmem:[#allocation5 + $0x458] sm:$0xff]
    %v241 = vld [vmem:[#allocation5 + $0x460] sm:$0xff]
    %v242 = vld [vmem:[#allocation5 + $0x468] sm:$0xff]
    %v243 = vld [vmem:[#allocation5 + $0x470] sm:$0xff]
    %v244 = vld [vmem:[#allocation5 + $0x478] sm:$0xff]
    %v245 = vld [vmem:[#allocation5 + $0x480] sm:$0xff]
    %v246 = vld [vmem:[#allocation5 + $0x488] sm:$0xff]
    %v247 = vld [vmem:[#allocation5 + $0x490] sm:$0xff]
    %v248 = vld [vmem:[#allocation5 + $0x498] sm:$0xff]
    %v249 = vld [vmem:[#allocation5 + $0x4a0] sm:$0xff]
    %v250 = vld [vmem:[#allocation5 + $0x4a8] sm:$0xff]
    %v251 = vld [vmem:[#allocation5 + $0x4b0] sm:$0xff]
    %v252 = vld [vmem:[#allocation5 + $0x4b8] sm:$0xff]
    %v253 = vld [vmem:[#allocation5 + $0x4c0] sm:$0xff]
    %v254 = vld [vmem:[#allocation5 + $0x4c8] sm:$0xff]
    %v255 = vld [vmem:[#allocation5 + $0x4d0] sm:$0xff]
    %v256 = vld [vmem:[#allocation5 + $0x4d8] sm:$0xff]
    %v257 = vld [vmem:[#allocation5 + $0x4e0] sm:$0xff]
    %v258 = vld [vmem:[#allocation5 + $0x4e8] sm:$0xff]
    %v259 = vld [vmem:[#allocation5 + $0x4f0] sm:$0xff]
    %v260 = vld [vmem:[#allocation5 + $0x4f8] sm:$0xff]
    %v261 = vld [vmem:[#allocation5 + $0x500] sm:$0xff]
    %v262 = vld [vmem:[#allocation5 + $0x508] sm:$0xff]
    %v263 = vld [vmem:[#allocation5 + $0x510] sm:$0xff]
    %v264 = vld [vmem:[#allocation5 + $0x518] sm:$0xff]
    %v265 = vld [vmem:[#allocation5 + $0x520] sm:$0xff]
    %v266 = vld [vmem:[#allocation5 + $0x528] sm:$0xff]
    %v267 = vld [vmem:[#allocation5 + $0x530] sm:$0xff]
    %v268 = vld [vmem:[#allocation5 + $0x538] sm:$0xff]
    %v269 = vld [vmem:[#allocation5 + $0x540] sm:$0xff]
    %v270 = vld [vmem:[#allocation5 + $0x548] sm:$0xff]
    %v271 = vld [vmem:[#allocation5 + $0x550] sm:$0xff]
    %v272 = vld [vmem:[#allocation5 + $0x558] sm:$0xff]
    %v273 = vld [vmem:[#allocation5 + $0x560] sm:$0xff]
    %v274 = vld [vmem:[#allocation5 + $0x568] sm:$0xff]
    %v275 = vld [vmem:[#allocation5 + $0x570] sm:$0xff]
    %v276 = vld [vmem:[#allocation5 + $0x578] sm:$0xff]
    %v277 = vld [vmem:[#allocation5 + $0x580] sm:$0xff]
    %v278 = vld [vmem:[#allocation5 + $0x588] sm:$0xff]
    %v279 = vld [vmem:[#allocation5 + $0x590] sm:$0xff]
    %v280 = vld [vmem:[#allocation5 + $0x598] sm:$0xff]
    %v281 = vld [vmem:[#allocation5 + $0x5a0] sm:$0xff]
    %v282 = vld [vmem:[#allocation5 + $0x5a8] sm:$0xff]
    %v283 = vld [vmem:[#allocation5 + $0x5b0] sm:$0xff]
    %v284 = vld [vmem:[#allocation5 + $0x5b8] sm:$0xff]
    %v285 = vld [vmem:[#allocation5 + $0x5c0] sm:$0xff]
    %v286 = vld [vmem:[#allocation5 + $0x5c8] sm:$0xff]
    %v287 = vld [vmem:[#allocation5 + $0x5d0] sm:$0xff]
    %v288 = vld [vmem:[#allocation5 + $0x5d8] sm:$0xff]
    %v289 = vld [vmem:[#allocation5 + $0x5e0] sm:$0xff]
    %v290 = vld [vmem:[#allocation5 + $0x5e8] sm:$0xff]
    %v291 = vld [vmem:[#allocation5 + $0x5f0] sm:$0xff]
    %v292 = vld [vmem:[#allocation5 + $0x5f8] sm:$0xff]
    %v293 = vld [vmem:[#allocation5 + $0x600] sm:$0xff]
    %v294 = vld [vmem:[#allocation5 + $0x608] sm:$0xff]
    %v295 = vld [vmem:[#allocation5 + $0x610] sm:$0xff]
    %v296 = vld [vmem:[#allocation5 + $0x618] sm:$0xff]
    %v297 = vld [vmem:[#allocation7] sm:$0xf]
    %v299 = vperm.slane %v297, 0
    %v300 = vperm.slane %v297, 1
    %v301 = vperm.slane %v297, 2
    %v302 = vperm.slane %v297, 3
    %v503 = vunpack.c.l.b16 %v101
    %v504 = vunpack.c.h.b16 %v101
    %v505 = vunpack.c.l.b16 %v102
    %v506 = vunpack.c.h.b16 %v102
    %v507 = vunpack.c.l.b16 %v103
    %v508 = vunpack.c.h.b16 %v103
    %v509 = vunpack.c.l.b16 %v104
    %v510 = vunpack.c.h.b16 %v104
    %v511 = vunpack.c.l.b16 %v105
    %v512 = vunpack.c.h.b16 %v105
    %v513 = vunpack.c.l.b16 %v106
    %v514 = vunpack.c.h.b16 %v106
    %v515 = vunpack.c.l.b16 %v107
    %v516 = vunpack.c.h.b16 %v107
    %v517 = vunpack.c.l.b16 %v108
    %v518 = vunpack.c.h.b16 %v108
    %v519 = vunpack.c.l.b16 %v109
    %v520 = vunpack.c.h.b16 %v109
    %v521 = vunpack.c.l.b16 %v110
    %v522 = vunpack.c.h.b16 %v110
    %v523 = vunpack.c.l.b16 %v111
    %v524 = vunpack.c.h.b16 %v111
    %v525 = vunpack.c.l.b16 %v112
    %v526 = vunpack.c.h.b16 %v112
    %v527 = vunpack.c.l.b16 %v113
    %v528 = vunpack.c.h.b16 %v113
    %v529 = vunpack.c.l.b16 %v114
    %v530 = vunpack.c.h.b16 %v114
    %v531 = vunpack.c.l.b16 %v115
    %v532 = vunpack.c.h.b16 %v115
    %v533 = vunpack.c.l.b16 %v116
    %v534 = vunpack.c.h.b16 %v116
    %v535 = vunpack.c.l.b16 %v117
    %v536 = vunpack.c.h.b16 %v117
    %v537 = vunpack.c.l.b16 %v118
    %v538 = vunpack.c.h.b16 %v118
    %v539 = vunpack.c.l.b16 %v119
    %v540 = vunpack.c.h.b16 %v119
    %v541 = vunpack.c.l.b16 %v120
    %v542 = vunpack.c.h.b16 %v120
    %v543 = vunpack.c.l.b16 %v121
    %v544 = vunpack.c.h.b16 %v121
    %v545 = vunpack.c.l.b16 %v122
    %v546 = vunpack.c.h.b16 %v122
    %v547 = vunpack.c.l.b16 %v123
    %v548 = vunpack.c.h.b16 %v123
    %v549 = vunpack.c.l.b16 %v124
    %v550 = vunpack.c.h.b16 %v124
    %v551 = vunpack.c.l.b16 %v125
    %v552 = vunpack.c.h.b16 %v125
    %v553 = vunpack.c.l.b16 %v126
    %v554 = vunpack.c.h.b16 %v126
    %v555 = vunpack.c.l.b16 %v127
    %v556 = vunpack.c.h.b16 %v127
    %v557 = vunpack.c.l.b16 %v128
    %v558 = vunpack.c.h.b16 %v128
    %v559 = vunpack.c.l.b16 %v129
    %v560 = vunpack.c.h.b16 %v129
    %v561 = vunpack.c.l.b16 %v130
    %v562 = vunpack.c.h.b16 %v130
    %v563 = vunpack.c.l.b16 %v131
    %v564 = vunpack.c.h.b16 %v131
    %v565 = vunpack.c.l.b16 %v132
    %v566 = vunpack.c.h.b16 %v132
    %v567 = vunpack.c.l.b16 %v133
    %v568 = vunpack.c.h.b16 %v133
    %v569 = vunpack.c.l.b16 %v134
    %v570 = vunpack.c.h.b16 %v134
    %v571 = vunpack.c.l.b16 %v135
    %v572 = vunpack.c.h.b16 %v135
    %v573 = vunpack.c.l.b16 %v136
    %v574 = vunpack.c.h.b16 %v136
    %v575 = vunpack.c.l.b16 %v137
    %v576 = vunpack.c.h.b16 %v137
    %v577 = vunpack.c.l.b16 %v138
    %v578 = vunpack.c.h.b16 %v138
    %v579 = vunpack.c.l.b16 %v139
    %v580 = vunpack.c.h.b16 %v139
    %v581 = vunpack.c.l.b16 %v140
    %v582 = vunpack.c.h.b16 %v140
    %v583 = vunpack.c.l.b16 %v141
    %v584 = vunpack.c.h.b16 %v141
    %v585 = vunpack.c.l.b16 %v142
    %v586 = vunpack.c.h.b16 %v142
    %v587 = vunpack.c.l.b16 %v143
    %v588 = vunpack.c.h.b16 %v143
    %v589 = vunpack.c.l.b16 %v144
    %v590 = vunpack.c.h.b16 %v144
    %v591 = vunpack.c.l.b16 %v145
    %v592 = vunpack.c.h.b16 %v145
    %v593 = vunpack.c.l.b16 %v146
    %v594 = vunpack.c.h.b16 %v146
    %v595 = vunpack.c.l.b16 %v147
    %v596 = vunpack.c.h.b16 %v147
    %v597 = vunpack.c.l.b16 %v148
    %v598 = vunpack.c.h.b16 %v148
    %v599 = vunpack.c.l.b16 %v149
    %v600 = vunpack.c.h.b16 %v149
    %v601 = vunpack.c.l.b16 %v150
    %v602 = vunpack.c.h.b16 %v150
    %v603 = vunpack.c.l.b16 %v151
    %v604 = vunpack.c.h.b16 %v151
    %v605 = vunpack.c.l.b16 %v152
    %v606 = vunpack.c.h.b16 %v152
    %v607 = vunpack.c.l.b16 %v153
    %v608 = vunpack.c.h.b16 %v153
    %v609 = vunpack.c.l.b16 %v154
    %v610 = vunpack.c.h.b16 %v154
    %v611 = vunpack.c.l.b16 %v155
    %v612 = vunpack.c.h.b16 %v155
    %v613 = vunpack.c.l.b16 %v156
    %v614 = vunpack.c.h.b16 %v156
    %v615 = vunpack.c.l.b16 %v157
    %v616 = vunpack.c.h.b16 %v157
    %v617 = vunpack.c.l.b16 %v158
    %v618 = vunpack.c.h.b16 %v158
    %v619 = vunpack.c.l.b16 %v159
    %v620 = vunpack.c.h.b16 %v159
    %v621 = vunpack.c.l.b16 %v160
    %v622 = vunpack.c.h.b16 %v160
    %v623 = vunpack.c.l.b16 %v161
    %v624 = vunpack.c.h.b16 %v161
    %v625 = vunpack.c.l.b16 %v162
    %v626 = vunpack.c.h.b16 %v162
    %v627 = vunpack.c.l.b16 %v163
    %v628 = vunpack.c.h.b16 %v163
    %v629 = vunpack.c.l.b16 %v164
    %v630 = vunpack.c.h.b16 %v164
    %v631 = vunpack.c.l.b16 %v165
    %v632 = vunpack.c.h.b16 %v165
    %v633 = vunpack.c.l.b16 %v166
    %v634 = vunpack.c.h.b16 %v166
    %v635 = vunpack.c.l.b16 %v167
    %v636 = vunpack.c.h.b16 %v167
    %v637 = vunpack.c.l.b16 %v168
    %v638 = vunpack.c.h.b16 %v168
    %v639 = vunpack.c.l.b16 %v169
    %v640 = vunpack.c.h.b16 %v169
    %v641 = vunpack.c.l.b16 %v170
    %v642 = vunpack.c.h.b16 %v170
    %v643 = vunpack.c.l.b16 %v171
    %v644 = vunpack.c.h.b16 %v171
    %v645 = vunpack.c.l.b16 %v172
    %v646 = vunpack.c.h.b16 %v172
    %v647 = vunpack.c.l.b16 %v173
    %v648 = vunpack.c.h.b16 %v173
    %v649 = vunpack.c.l.b16 %v174
    %v650 = vunpack.c.h.b16 %v174
    %v651 = vunpack.c.l.b16 %v175
    %v652 = vunpack.c.h.b16 %v175
    %v653 = vunpack.c.l.b16 %v176
    %v654 = vunpack.c.h.b16 %v176
    %v655 = vunpack.c.l.b16 %v177
    %v656 = vunpack.c.h.b16 %v177
    %v657 = vunpack.c.l.b16 %v178
    %v658 = vunpack.c.h.b16 %v178
    %v659 = vunpack.c.l.b16 %v179
    %v660 = vunpack.c.h.b16 %v179
    %v661 = vunpack.c.l.b16 %v180
    %v662 = vunpack.c.h.b16 %v180
    %v663 = vunpack.c.l.b16 %v181
    %v664 = vunpack.c.h.b16 %v181
    %v665 = vunpack.c.l.b16 %v182
    %v666 = vunpack.c.h.b16 %v182
    %v667 = vunpack.c.l.b16 %v183
    %v668 = vunpack.c.h.b16 %v183
    %v669 = vunpack.c.l.b16 %v184
    %v670 = vunpack.c.h.b16 %v184
    %v671 = vunpack.c.l.b16 %v185
    %v672 = vunpack.c.h.b16 %v185
    %v673 = vunpack.c.l.b16 %v186
    %v674 = vunpack.c.h.b16 %v186
    %v675 = vunpack.c.l.b16 %v187
    %v676 = vunpack.c.h.b16 %v187
    %v677 = vunpack.c.l.b16 %v188
    %v678 = vunpack.c.h.b16 %v188
    %v679 = vunpack.c.l.b16 %v189
    %v680 = vunpack.c.h.b16 %v189
    %v681 = vunpack.c.l.b16 %v190
    %v682 = vunpack.c.h.b16 %v190
    %v683 = vunpack.c.l.b16 %v191
    %v684 = vunpack.c.h.b16 %v191
    %v685 = vunpack.c.l.b16 %v192
    %v686 = vunpack.c.h.b16 %v192
    %v687 = vunpack.c.l.b16 %v193
    %v688 = vunpack.c.h.b16 %v193
    %v689 = vunpack.c.l.b16 %v194
    %v690 = vunpack.c.h.b16 %v194
    %v691 = vunpack.c.l.b16 %v195
    %v692 = vunpack.c.h.b16 %v195
    %v693 = vunpack.c.l.b16 %v196
    %v694 = vunpack.c.h.b16 %v196
    %v695 = vunpack.c.l.b16 %v197
    %v696 = vunpack.c.h.b16 %v197
    %v697 = vunpack.c.l.b16 %v198
    %v698 = vunpack.c.h.b16 %v198
    %v699 = vunpack.c.l.b16 %v199
    %v700 = vunpack.c.h.b16 %v199
    %v701 = vunpack.c.l.b16 %v200
    %v702 = vunpack.c.h.b16 %v200
    %v703 = vunpack.c.l.b16 %v201
    %v704 = vunpack.c.h.b16 %v201
    %v705 = vunpack.c.l.b16 %v202
    %v706 = vunpack.c.h.b16 %v202
    %v707 = vunpack.c.l.b16 %v203
    %v708 = vunpack.c.h.b16 %v203
    %v709 = vunpack.c.l.b16 %v204
    %v710 = vunpack.c.h.b16 %v204
    %v711 = vunpack.c.l.b16 %v205
    %v712 = vunpack.c.h.b16 %v205
    %v713 = vunpack.c.l.b16 %v206
    %v714 = vunpack.c.h.b16 %v206
    %v715 = vunpack.c.l.b16 %v207
    %v716 = vunpack.c.h.b16 %v207
    %v717 = vunpack.c.l.b16 %v208
    %v718 = vunpack.c.h.b16 %v208
    %v719 = vunpack.c.l.b16 %v209
    %v720 = vunpack.c.h.b16 %v209
    %v721 = vunpack.c.l.b16 %v210
    %v722 = vunpack.c.h.b16 %v210
    %v723 = vunpack.c.l.b16 %v211
    %v724 = vunpack.c.h.b16 %v211
    %v725 = vunpack.c.l.b16 %v212
    %v726 = vunpack.c.h.b16 %v212
    %v727 = vunpack.c.l.b16 %v213
    %v728 = vunpack.c.h.b16 %v213
    %v729 = vunpack.c.l.b16 %v214
    %v730 = vunpack.c.h.b16 %v214
    %v731 = vunpack.c.l.b16 %v215
    %v732 = vunpack.c.h.b16 %v215
    %v733 = vunpack.c.l.b16 %v216
    %v734 = vunpack.c.h.b16 %v216
    %v735 = vunpack.c.l.b16 %v217
    %v736 = vunpack.c.h.b16 %v217
    %v737 = vunpack.c.l.b16 %v218
    %v738 = vunpack.c.h.b16 %v218
    %v739 = vunpack.c.l.b16 %v219
    %v740 = vunpack.c.h.b16 %v219
    %v741 = vunpack.c.l.b16 %v220
    %v742 = vunpack.c.h.b16 %v220
    %v743 = vunpack.c.l.b16 %v221
    %v744 = vunpack.c.h.b16 %v221
    %v745 = vunpack.c.l.b16 %v222
    %v746 = vunpack.c.h.b16 %v222
    %v747 = vunpack.c.l.b16 %v223
    %v748 = vunpack.c.h.b16 %v223
    %v749 = vunpack.c.l.b16 %v224
    %v750 = vunpack.c.h.b16 %v224
    %v751 = vunpack.c.l.b16 %v225
    %v752 = vunpack.c.h.b16 %v225
    %v753 = vunpack.c.l.b16 %v226
    %v754 = vunpack.c.h.b16 %v226
    %v755 = vunpack.c.l.b16 %v227
    %v756 = vunpack.c.h.b16 %v227
    %v757 = vunpack.c.l.b16 %v228
    %v758 = vunpack.c.h.b16 %v228
    %v759 = vunpack.c.l.b16 %v229
    %v760 = vunpack.c.h.b16 %v229
    %v761 = vunpack.c.l.b16 %v230
    %v762 = vunpack.c.h.b16 %v230
    %v763 = vunpack.c.l.b16 %v231
    %v764 = vunpack.c.h.b16 %v231
    %v765 = vunpack.c.l.b16 %v232
    %v766 = vunpack.c.h.b16 %v232
    %v767 = vunpack.c.l.b16 %v233
    %v768 = vunpack.c.h.b16 %v233
    %v769 = vunpack.c.l.b16 %v234
    %v770 = vunpack.c.h.b16 %v234
    %v771 = vunpack.c.l.b16 %v235
    %v772 = vunpack.c.h.b16 %v235
    %v773 = vunpack.c.l.b16 %v236
    %v774 = vunpack.c.h.b16 %v236
    %v775 = vunpack.c.l.b16 %v237
    %v776 = vunpack.c.h.b16 %v237
    %v777 = vunpack.c.l.b16 %v238
    %v778 = vunpack.c.h.b16 %v238
    %v779 = vunpack.c.l.b16 %v239
    %v780 = vunpack.c.h.b16 %v239
    %v781 = vunpack.c.l.b16 %v240
    %v782 = vunpack.c.h.b16 %v240
    %v783 = vunpack.c.l.b16 %v241
    %v784 = vunpack.c.h.b16 %v241
    %v785 = vunpack.c.l.b16 %v242
    %v786 = vunpack.c.h.b16 %v242
    %v787 = vunpack.c.l.b16 %v243
    %v788 = vunpack.c.h.b16 %v243
    %v789 = vunpack.c.l.b16 %v244
    %v790 = vunpack.c.h.b16 %v244
    %v791 = vunpack.c.l.b16 %v245
    %v792 = vunpack.c.h.b16 %v245
    %v793 = vunpack.c.l.b16 %v246
    %v794 = vunpack.c.h.b16 %v246
    %v795 = vunpack.c.l.b16 %v247
    %v796 = vunpack.c.h.b16 %v247
    %v797 = vunpack.c.l.b16 %v248
    %v798 = vunpack.c.h.b16 %v248
    %v799 = vunpack.c.l.b16 %v249
    %v800 = vunpack.c.h.b16 %v249
    %v801 = vunpack.c.l.b16 %v250
    %v802 = vunpack.c.h.b16 %v250
    %v803 = vunpack.c.l.b16 %v251
    %v804 = vunpack.c.h.b16 %v251
    %v805 = vunpack.c.l.b16 %v252
    %v806 = vunpack.c.h.b16 %v252
    %v807 = vunpack.c.l.b16 %v253
    %v808 = vunpack.c.h.b16 %v253
    %v809 = vunpack.c.l.b16 %v254
    %v810 = vunpack.c.h.b16 %v254
    %v811 = vunpack.c.l.b16 %v255
    %v812 = vunpack.c.h.b16 %v255
    %v813 = vunpack.c.l.b16 %v256
    %v814 = vunpack.c.h.b16 %v256
    %v815 = vunpack.c.l.b16 %v257
    %v816 = vunpack.c.h.b16 %v257
    %v817 = vunpack.c.l.b16 %v258
    %v818 = vunpack.c.h.b16 %v258
    %v819 = vunpack.c.l.b16 %v259
    %v820 = vunpack.c.h.b16 %v259
    %v821 = vunpack.c.l.b16 %v260
    %v822 = vunpack.c.h.b16 %v260
    %v823 = vunpack.c.l.b16 %v261
    %v824 = vunpack.c.h.b16 %v261
    %v825 = vunpack.c.l.b16 %v262
    %v826 = vunpack.c.h.b16 %v262
    %v827 = vunpack.c.l.b16 %v263
    %v828 = vunpack.c.h.b16 %v263
    %v829 = vunpack.c.l.b16 %v264
    %v830 = vunpack.c.h.b16 %v264
    %v831 = vunpack.c.l.b16 %v265
    %v832 = vunpack.c.h.b16 %v265
    %v833 = vunpack.c.l.b16 %v266
    %v834 = vunpack.c.h.b16 %v266
    %v835 = vunpack.c.l.b16 %v267
    %v836 = vunpack.c.h.b16 %v267
    %v837 = vunpack.c.l.b16 %v268
    %v838 = vunpack.c.h.b16 %v268
    %v839 = vunpack.c.l.b16 %v269
    %v840 = vunpack.c.h.b16 %v269
    %v841 = vunpack.c.l.b16 %v270
    %v842 = vunpack.c.h.b16 %v270
    %v843 = vunpack.c.l.b16 %v271
    %v844 = vunpack.c.h.b16 %v271
    %v845 = vunpack.c.l.b16 %v272
    %v846 = vunpack.c.h.b16 %v272
    %v847 = vunpack.c.l.b16 %v273
    %v848 = vunpack.c.h.b16 %v273
    %v849 = vunpack.c.l.b16 %v274
    %v850 = vunpack.c.h.b16 %v274
    %v851 = vunpack.c.l.b16 %v275
    %v852 = vunpack.c.h.b16 %v275
    %v853 = vunpack.c.l.b16 %v276
    %v854 = vunpack.c.h.b16 %v276
    %v855 = vunpack.c.l.b16 %v277
    %v856 = vunpack.c.h.b16 %v277
    %v857 = vunpack.c.l.b16 %v278
    %v858 = vunpack.c.h.b16 %v278
    %v859 = vunpack.c.l.b16 %v279
    %v860 = vunpack.c.h.b16 %v279
    %v861 = vunpack.c.l.b16 %v280
    %v862 = vunpack.c.h.b16 %v280
    %v863 = vunpack.c.l.b16 %v281
    %v864 = vunpack.c.h.b16 %v281
    %v865 = vunpack.c.l.b16 %v282
    %v866 = vunpack.c.h.b16 %v282
    %v867 = vunpack.c.l.b16 %v283
    %v868 = vunpack.c.h.b16 %v283
    %v869 = vunpack.c.l.b16 %v284
    %v870 = vunpack.c.h.b16 %v284
    %v871 = vunpack.c.l.b16 %v285
    %v872 = vunpack.c.h.b16 %v285
    %v873 = vunpack.c.l.b16 %v286
    %v874 = vunpack.c.h.b16 %v286
    %v875 = vunpack.c.l.b16 %v287
    %v876 = vunpack.c.h.b16 %v287
    %v877 = vunpack.c.l.b16 %v288
    %v878 = vunpack.c.h.b16 %v288
    %v879 = vunpack.c.l.b16 %v289
    %v880 = vunpack.c.h.b16 %v289
    %v881 = vunpack.c.l.b16 %v290
    %v882 = vunpack.c.h.b16 %v290
    %v883 = vunpack.c.l.b16 %v291
    %v884 = vunpack.c.h.b16 %v291
    %v885 = vunpack.c.l.b16 %v292
    %v886 = vunpack.c.h.b16 %v292
    %v887 = vunpack.c.l.b16 %v293
    %v888 = vunpack.c.h.b16 %v293
    %v889 = vunpack.c.l.b16 %v294
    %v890 = vunpack.c.h.b16 %v294
    %v891 = vunpack.c.l.b16 %v295
    %v892 = vunpack.c.h.b16 %v295
    %v893 = vunpack.c.l.b16 %v296
    %v894 = vunpack.c.h.b16 %v296
    %v895 = vpack.c.b16 %v507, %v503
    %v896 = vpack.c.b16 %v508, %v504
    %v897 = vpack.c.b16 %v509, %v505
    %v898 = vpack.c.b16 %v510, %v506
    %v899 = vpack.c.b16 %v515, %v511
    %v900 = vpack.c.b16 %v516, %v512
    %v901 = vpack.c.b16 %v517, %v513
    %v902 = vpack.c.b16 %v518, %v514
    %v903 = vpack.c.b16 %v523, %v519
    %v904 = vpack.c.b16 %v524, %v520
    %v905 = vpack.c.b16 %v525, %v521
    %v906 = vpack.c.b16 %v526, %v522
    %v907 = vpack.c.b16 %v531, %v527
    %v908 = vpack.c.b16 %v532, %v528
    %v909 = vpack.c.b16 %v533, %v529
    %v910 = vpack.c.b16 %v534, %v530
    %v911 = vpack.c.b16 %v539, %v535
    %v912 = vpack.c.b16 %v540, %v536
    %v913 = vpack.c.b16 %v541, %v537
    %v914 = vpack.c.b16 %v542, %v538
    %v915 = vpack.c.b16 %v547, %v543
    %v916 = vpack.c.b16 %v548, %v544
    %v917 = vpack.c.b16 %v549, %v545
    %v918 = vpack.c.b16 %v550, %v546
    %v919 = vpack.c.b16 %v555, %v551
    %v920 = vpack.c.b16 %v556, %v552
    %v921 = vpack.c.b16 %v557, %v553
    %v922 = vpack.c.b16 %v558, %v554
    %v923 = vpack.c.b16 %v563, %v559
    %v924 = vpack.c.b16 %v564, %v560
    %v925 = vpack.c.b16 %v565, %v561
    %v926 = vpack.c.b16 %v566, %v562
    %v927 = vpack.c.b16 %v571, %v567
    %v928 = vpack.c.b16 %v572, %v568
    %v929 = vpack.c.b16 %v573, %v569
    %v930 = vpack.c.b16 %v574, %v570
    %v931 = vpack.c.b16 %v579, %v575
    %v932 = vpack.c.b16 %v580, %v576
    %v933 = vpack.c.b16 %v581, %v577
    %v934 = vpack.c.b16 %v582, %v578
    %v935 = vpack.c.b16 %v587, %v583
    %v936 = vpack.c.b16 %v588, %v584
    %v937 = vpack.c.b16 %v589, %v585
    %v938 = vpack.c.b16 %v590, %v586
    %v939 = vpack.c.b16 %v595, %v591
    %v940 = vpack.c.b16 %v596, %v592
    %v941 = vpack.c.b16 %v597, %v593
    %v942 = vpack.c.b16 %v598, %v594
    %v943 = vpack.c.b16 %v603, %v599
    %v944 = vpack.c.b16 %v604, %v600
    %v945 = vpack.c.b16 %v605, %v601
    %v946 = vpack.c.b16 %v606, %v602
    %v947 = vpack.c.b16 %v611, %v607
    %v948 = vpack.c.b16 %v612, %v608
    %v949 = vpack.c.b16 %v613, %v609
    %v950 = vpack.c.b16 %v614, %v610
    %v951 = vpack.c.b16 %v619, %v615
    %v952 = vpack.c.b16 %v620, %v616
    %v953 = vpack.c.b16 %v621, %v617
    %v954 = vpack.c.b16 %v622, %v618
    %v955 = vpack.c.b16 %v627, %v623
    %v956 = vpack.c.b16 %v628, %v624
    %v957 = vpack.c.b16 %v629, %v625
    %v958 = vpack.c.b16 %v630, %v626
    %v959 = vpack.c.b16 %v635, %v631
    %v960 = vpack.c.b16 %v636, %v632
    %v961 = vpack.c.b16 %v637, %v633
    %v962 = vpack.c.b16 %v638, %v634
    %v963 = vpack.c.b16 %v643, %v639
    %v964 = vpack.c.b16 %v644, %v640
    %v965 = vpack.c.b16 %v645, %v641
    %v966 = vpack.c.b16 %v646, %v642
    %v967 = vpack.c.b16 %v651, %v647
    %v968 = vpack.c.b16 %v652, %v648
    %v969 = vpack.c.b16 %v653, %v649
    %v970 = vpack.c.b16 %v654, %v650
    %v971 = vpack.c.b16 %v659, %v655
    %v972 = vpack.c.b16 %v660, %v656
    %v973 = vpack.c.b16 %v661, %v657
    %v974 = vpack.c.b16 %v662, %v658
    %v975 = vpack.c.b16 %v667, %v663
    %v976 = vpack.c.b16 %v668, %v664
    %v977 = vpack.c.b16 %v669, %v665
    %v978 = vpack.c.b16 %v670, %v666
    %v979 = vpack.c.b16 %v675, %v671
    %v980 = vpack.c.b16 %v676, %v672
    %v981 = vpack.c.b16 %v677, %v673
    %v982 = vpack.c.b16 %v678, %v674
    %v983 = vpack.c.b16 %v683, %v679
    %v984 = vpack.c.b16 %v684, %v680
    %v985 = vpack.c.b16 %v685, %v681
    %v986 = vpack.c.b16 %v686, %v682
    %v987 = vpack.c.b16 %v691, %v687
    %v988 = vpack.c.b16 %v692, %v688
    %v989 = vpack.c.b16 %v693, %v689
    %v990 = vpack.c.b16 %v694, %v690
    %v991 = vpack.c.b16 %v699, %v695
    %v992 = vpack.c.b16 %v700, %v696
    %v993 = vpack.c.b16 %v701, %v697
    %v994 = vpack.c.b16 %v702, %v698
    %v995 = vpack.c.b16 %v707, %v703
    %v996 = vpack.c.b16 %v708, %v704
    %v997 = vpack.c.b16 %v709, %v705
    %v998 = vpack.c.b16 %v710, %v706
    %v999 = vpack.c.b16 %v715, %v711
    %v1000 = vpack.c.b16 %v716, %v712
    %v1001 = vpack.c.b16 %v717, %v713
    %v1002 = vpack.c.b16 %v718, %v714
    %v1003 = vpack.c.b16 %v723, %v719
    %v1004 = vpack.c.b16 %v724, %v720
    %v1005 = vpack.c.b16 %v725, %v721
    %v1006 = vpack.c.b16 %v726, %v722
    %v1007 = vpack.c.b16 %v731, %v727
    %v1008 = vpack.c.b16 %v732, %v728
    %v1009 = vpack.c.b16 %v733, %v729
    %v1010 = vpack.c.b16 %v734, %v730
    %v1011 = vpack.c.b16 %v739, %v735
    %v1012 = vpack.c.b16 %v740, %v736
    %v1013 = vpack.c.b16 %v741, %v737
    %v1014 = vpack.c.b16 %v742, %v738
    %v1015 = vpack.c.b16 %v747, %v743
    %v1016 = vpack.c.b16 %v748, %v744
    %v1017 = vpack.c.b16 %v749, %v745
    %v1018 = vpack.c.b16 %v750, %v746
    %v1019 = vpack.c.b16 %v755, %v751
    %v1020 = vpack.c.b16 %v756, %v752
    %v1021 = vpack.c.b16 %v757, %v753
    %v1022 = vpack.c.b16 %v758, %v754
    %v1023 = vpack.c.b16 %v763, %v759
    %v1024 = vpack.c.b16 %v764, %v760
    %v1025 = vpack.c.b16 %v765, %v761
    %v1026 = vpack.c.b16 %v766, %v762
    %v1027 = vpack.c.b16 %v771, %v767
    %v1028 = vpack.c.b16 %v772, %v768
    %v1029 = vpack.c.b16 %v773, %v769
    %v1030 = vpack.c.b16 %v774, %v770
    %v1031 = vpack.c.b16 %v779, %v775
    %v1032 = vpack.c.b16 %v780, %v776
    %v1033 = vpack.c.b16 %v781, %v777
    %v1034 = vpack.c.b16 %v782, %v778
    %v1035 = vpack.c.b16 %v787, %v783
    %v1036 = vpack.c.b16 %v788, %v784
    %v1037 = vpack.c.b16 %v789, %v785
    %v1038 = vpack.c.b16 %v790, %v786
    %v1039 = vpack.c.b16 %v795, %v791
    %v1040 = vpack.c.b16 %v796, %v792
    %v1041 = vpack.c.b16 %v797, %v793
    %v1042 = vpack.c.b16 %v798, %v794
    %v1043 = vpack.c.b16 %v803, %v799
    %v1044 = vpack.c.b16 %v804, %v800
    %v1045 = vpack.c.b16 %v805, %v801
    %v1046 = vpack.c.b16 %v806, %v802
    %v1047 = vpack.c.b16 %v811, %v807
    %v1048 = vpack.c.b16 %v812, %v808
    %v1049 = vpack.c.b16 %v813, %v809
    %v1050 = vpack.c.b16 %v814, %v810
    %v1051 = vpack.c.b16 %v819, %v815
    %v1052 = vpack.c.b16 %v820, %v816
    %v1053 = vpack.c.b16 %v821, %v817
    %v1054 = vpack.c.b16 %v822, %v818
    %v1055 = vpack.c.b16 %v827, %v823
    %v1056 = vpack.c.b16 %v828, %v824
    %v1057 = vpack.c.b16 %v829, %v825
    %v1058 = vpack.c.b16 %v830, %v826
    %v1059 = vpack.c.b16 %v835, %v831
    %v1060 = vpack.c.b16 %v836, %v832
    %v1061 = vpack.c.b16 %v837, %v833
    %v1062 = vpack.c.b16 %v838, %v834
    %v1063 = vpack.c.b16 %v843, %v839
    %v1064 = vpack.c.b16 %v844, %v840
    %v1065 = vpack.c.b16 %v845, %v841
    %v1066 = vpack.c.b16 %v846, %v842
    %v1067 = vpack.c.b16 %v851, %v847
    %v1068 = vpack.c.b16 %v852, %v848
    %v1069 = vpack.c.b16 %v853, %v849
    %v1070 = vpack.c.b16 %v854, %v850
    %v1071 = vpack.c.b16 %v859, %v855
    %v1072 = vpack.c.b16 %v860, %v856
    %v1073 = vpack.c.b16 %v861, %v857
    %v1074 = vpack.c.b16 %v862, %v858
    %v1075 = vpack.c.b16 %v867, %v863
    %v1076 = vpack.c.b16 %v868, %v864
    %v1077 = vpack.c.b16 %v869, %v865
    %v1078 = vpack.c.b16 %v870, %v866
    %v1079 = vpack.c.b16 %v875, %v871
    %v1080 = vpack.c.b16 %v876, %v872
    %v1081 = vpack.c.b16 %v877, %v873
    %v1082 = vpack.c.b16 %v878, %v874
    %v1083 = vpack.c.b16 %v883, %v879
    %v1084 = vpack.c.b16 %v884, %v880
    %v1085 = vpack.c.b16 %v885, %v881
    %v1086 = vpack.c.b16 %v886, %v882
    %v1087 = vpack.c.b16 %v891, %v887
    %v1088 = vpack.c.b16 %v892, %v888
    %v1089 = vpack.c.b16 %v893, %v889
    %v1090 = vpack.c.b16 %v894, %v890
    %vm1287 = vcmask 130048
    %v1289 = vsel %vm1287, %v100, 0
    %1291 = vmatpush.bf16.msra.mxu0 %v923
    %1292 = vmatpush.bf16.msra.mxu0 %v919
    %1293 = vmatpush.bf16.msra.mxu0 %v915
    %1294 = vmatpush.bf16.msra.mxu0 %v911
    %1295 = vmatpush.bf16.msra.mxu0 %v907
    %1296 = vmatpush.bf16.msra.mxu0 %v903
    %1297 = vmatpush.bf16.msra.mxu0 %v899
    %1298 = vmatpush.bf16.msra.mxu0 %v895
    %1299 = vmatmul.bf16.gmra.mxu0 %v94
    %v1300 = vpop.f32.mrf.mxu0
    %v1301 = vadd.f32 %v299, %v1300
    %v1302 = vpop.f32.mrf.mxu0
    %1303 = vdwg.mxu0
    %1304 = vmatpush.bf16.msra.mxu0 %v955
    %1305 = vmatpush.bf16.msra.mxu0 %v951
    %1306 = vmatpush.bf16.msra.mxu0 %v947
    %1307 = vmatpush.bf16.msra.mxu0 %v943
    %1308 = vmatpush.bf16.msra.mxu0 %v939
    %1309 = vmatpush.bf16.msra.mxu0 %v935
    %1310 = vmatpush.bf16.msra.mxu0 %v931
    %1311 = vmatpush.bf16.msra.mxu0 %v927
    %1312 = vmatmul.bf16.gmra.mxu0 %v95
    %v1313 = vpop.f32.mrf.mxu0
    %v1314 = vadd.f32 %v1301, %v1313
    %v1315 = vpop.f32.mrf.mxu0
    %1316 = vdwg.mxu0
    %1317 = vmatpush.bf16.msra.mxu0 %v987
    %1318 = vmatpush.bf16.msra.mxu0 %v983
    %1319 = vmatpush.bf16.msra.mxu0 %v979
    %1320 = vmatpush.bf16.msra.mxu0 %v975
    %1321 = vmatpush.bf16.msra.mxu0 %v971
    %1322 = vmatpush.bf16.msra.mxu0 %v967
    %1323 = vmatpush.bf16.msra.mxu0 %v963
    %1324 = vmatpush.bf16.msra.mxu0 %v959
    %1325 = vmatmul.bf16.gmra.mxu0 %v96
    %v1326 = vpop.f32.mrf.mxu0
    %v1327 = vadd.f32 %v1314, %v1326
    %v1328 = vpop.f32.mrf.mxu0
    %1329 = vdwg.mxu0
    %1330 = vmatpush.bf16.msra.mxu0 %v1019
    %1331 = vmatpush.bf16.msra.mxu0 %v1015
    %1332 = vmatpush.bf16.msra.mxu0 %v1011
    %1333 = vmatpush.bf16.msra.mxu0 %v1007
    %1334 = vmatpush.bf16.msra.mxu0 %v1003
    %1335 = vmatpush.bf16.msra.mxu0 %v999
    %1336 = vmatpush.bf16.msra.mxu0 %v995
    %1337 = vmatpush.bf16.msra.mxu0 %v991
    %1338 = vmatmul.bf16.gmra.mxu0 %v97
    %v1339 = vpop.f32.mrf.mxu0
    %v1340 = vadd.f32 %v1327, %v1339
    %v1341 = vpop.f32.mrf.mxu0
    %1342 = vdwg.mxu0
    %1343 = vmatpush.bf16.msra.mxu0 %v1051
    %1344 = vmatpush.bf16.msra.mxu0 %v1047
    %1345 = vmatpush.bf16.msra.mxu0 %v1043
    %1346 = vmatpush.bf16.msra.mxu0 %v1039
    %1347 = vmatpush.bf16.msra.mxu0 %v1035
    %1348 = vmatpush.bf16.msra.mxu0 %v1031
    %1349 = vmatpush.bf16.msra.mxu0 %v1027
    %1350 = vmatpush.bf16.msra.mxu0 %v1023
    %1351 = vmatmul.bf16.gmra.mxu0 %v98
    %v1352 = vpop.f32.mrf.mxu0
    %v1353 = vadd.f32 %v1340, %v1352
    %v1354 = vpop.f32.mrf.mxu0
    %1355 = vdwg.mxu0
    %1356 = vmatpush.bf16.msra.mxu0 %v1083
    %1357 = vmatpush.bf16.msra.mxu0 %v1079
    %1358 = vmatpush.bf16.msra.mxu0 %v1075
    %1359 = vmatpush.bf16.msra.mxu0 %v1071
    %1360 = vmatpush.bf16.msra.mxu0 %v1067
    %1361 = vmatpush.bf16.msra.mxu0 %v1063
    %1362 = vmatpush.bf16.msra.mxu0 %v1059
    %1363 = vmatpush.bf16.msra.mxu0 %v1055
    %1364 = vmatmul.bf16.gmra.mxu0 %v99
    %v1365 = vpop.f32.mrf.mxu0
    %v1366 = vadd.f32 %v1353, %v1365
    %v1367 = vpop.f32.mrf.mxu0
    %1368 = vdwg.mxu0
    %1369 = vmatpush.bf16.msra.mxu0 0
    %1370 = vmatpush.bf16.msra.mxu0 0
    %1371 = vmatpush.bf16.msra.mxu0 0
    %1372 = vmatpush.bf16.msra.mxu0 0
    %1373 = vmatpush.bf16.msra.mxu0 0
    %1374 = vmatpush.bf16.msra.mxu0 0
    %1375 = vmatpush.bf16.msra.mxu0 0
    %1376 = vmatpush.bf16.msra.mxu0 %v1087
    %1377 = vmatmul.bf16.gmra.mxu0 %v1289
    %v1378 = vpop.f32.mrf.mxu0
    %v1379 = vadd.f32 %v1366, %v1378
    %v1380 = vpop.f32.mrf.mxu0
    %1381 = vdwg.mxu0
    %1382 = vmatpush.bf16.msra.mxu0 %v924
    %1383 = vmatpush.bf16.msra.mxu0 %v920
    %1384 = vmatpush.bf16.msra.mxu0 %v916
    %1385 = vmatpush.bf16.msra.mxu0 %v912
    %1386 = vmatpush.bf16.msra.mxu0 %v908
    %1387 = vmatpush.bf16.msra.mxu0 %v904
    %1388 = vmatpush.bf16.msra.mxu0 %v900
    %1389 = vmatpush.bf16.msra.mxu0 %v896
    %1390 = vmatmul.bf16.gmra.mxu0 %v94
    %v1391 = vpop.f32.mrf.mxu0
    %v1392 = vadd.f32 %v300, %v1391
    %v1393 = vpop.f32.mrf.mxu0
    %1394 = vdwg.mxu0
    %1395 = vmatpush.bf16.msra.mxu0 %v956
    %1396 = vmatpush.bf16.msra.mxu0 %v952
    %1397 = vmatpush.bf16.msra.mxu0 %v948
    %1398 = vmatpush.bf16.msra.mxu0 %v944
    %1399 = vmatpush.bf16.msra.mxu0 %v940
    %1400 = vmatpush.bf16.msra.mxu0 %v936
    %1401 = vmatpush.bf16.msra.mxu0 %v932
    %1402 = vmatpush.bf16.msra.mxu0 %v928
    %1403 = vmatmul.bf16.gmra.mxu0 %v95
    %v1404 = vpop.f32.mrf.mxu0
    %v1405 = vadd.f32 %v1392, %v1404
    %v1406 = vpop.f32.mrf.mxu0
    %1407 = vdwg.mxu0
    %1408 = vmatpush.bf16.msra.mxu0 %v988
    %1409 = vmatpush.bf16.msra.mxu0 %v984
    %1410 = vmatpush.bf16.msra.mxu0 %v980
    %1411 = vmatpush.bf16.msra.mxu0 %v976
    %1412 = vmatpush.bf16.msra.mxu0 %v972
    %1413 = vmatpush.bf16.msra.mxu0 %v968
    %1414 = vmatpush.bf16.msra.mxu0 %v964
    %1415 = vmatpush.bf16.msra.mxu0 %v960
    %1416 = vmatmul.bf16.gmra.mxu0 %v96
    %v1417 = vpop.f32.mrf.mxu0
    %v1418 = vadd.f32 %v1405, %v1417
    %v1419 = vpop.f32.mrf.mxu0
    %1420 = vdwg.mxu0
    %1421 = vmatpush.bf16.msra.mxu0 %v1020
    %1422 = vmatpush.bf16.msra.mxu0 %v1016
    %1423 = vmatpush.bf16.msra.mxu0 %v1012
    %1424 = vmatpush.bf16.msra.mxu0 %v1008
    %1425 = vmatpush.bf16.msra.mxu0 %v1004
    %1426 = vmatpush.bf16.msra.mxu0 %v1000
    %1427 = vmatpush.bf16.msra.mxu0 %v996
    %1428 = vmatpush.bf16.msra.mxu0 %v992
    %1429 = vmatmul.bf16.gmra.mxu0 %v97
    %v1430 = vpop.f32.mrf.mxu0
    %v1431 = vadd.f32 %v1418, %v1430
    %v1432 = vpop.f32.mrf.mxu0
    %1433 = vdwg.mxu0
    %1434 = vmatpush.bf16.msra.mxu0 %v1052
    %1435 = vmatpush.bf16.msra.mxu0 %v1048
    %1436 = vmatpush.bf16.msra.mxu0 %v1044
    %1437 = vmatpush.bf16.msra.mxu0 %v1040
    %1438 = vmatpush.bf16.msra.mxu0 %v1036
    %1439 = vmatpush.bf16.msra.mxu0 %v1032
    %1440 = vmatpush.bf16.msra.mxu0 %v1028
    %1441 = vmatpush.bf16.msra.mxu0 %v1024
    %1442 = vmatmul.bf16.gmra.mxu0 %v98
    %v1443 = vpop.f32.mrf.mxu0
    %v1444 = vadd.f32 %v1431, %v1443
    %v1445 = vpop.f32.mrf.mxu0
    %1446 = vdwg.mxu0
    %1447 = vmatpush.bf16.msra.mxu0 %v1084
    %1448 = vmatpush.bf16.msra.mxu0 %v1080
    %1449 = vmatpush.bf16.msra.mxu0 %v1076
    %1450 = vmatpush.bf16.msra.mxu0 %v1072
    %1451 = vmatpush.bf16.msra.mxu0 %v1068
    %1452 = vmatpush.bf16.msra.mxu0 %v1064
    %1453 = vmatpush.bf16.msra.mxu0 %v1060
    %1454 = vmatpush.bf16.msra.mxu0 %v1056
    %1455 = vmatmul.bf16.gmra.mxu0 %v99
    %v1456 = vpop.f32.mrf.mxu0
    %v1457 = vadd.f32 %v1444, %v1456
    %v1458 = vpop.f32.mrf.mxu0
    %1459 = vdwg.mxu0
    %1460 = vmatpush.bf16.msra.mxu0 0
    %1461 = vmatpush.bf16.msra.mxu0 0
    %1462 = vmatpush.bf16.msra.mxu0 0
    %1463 = vmatpush.bf16.msra.mxu0 0
    %1464 = vmatpush.bf16.msra.mxu0 0
    %1465 = vmatpush.bf16.msra.mxu0 0
    %1466 = vmatpush.bf16.msra.mxu0 0
    %1467 = vmatpush.bf16.msra.mxu0 %v1088
    %1468 = vmatmul.bf16.gmra.mxu0 %v1289
    %v1469 = vpop.f32.mrf.mxu0
    %v1470 = vadd.f32 %v1457, %v1469
    %v1471 = vpop.f32.mrf.mxu0
    %1472 = vdwg.mxu0
    %1473 = vmatpush.bf16.msra.mxu0 %v925
    %1474 = vmatpush.bf16.msra.mxu0 %v921
    %1475 = vmatpush.bf16.msra.mxu0 %v917
    %1476 = vmatpush.bf16.msra.mxu0 %v913
    %1477 = vmatpush.bf16.msra.mxu0 %v909
    %1478 = vmatpush.bf16.msra.mxu0 %v905
    %1479 = vmatpush.bf16.msra.mxu0 %v901
    %1480 = vmatpush.bf16.msra.mxu0 %v897
    %1481 = vmatmul.bf16.gmra.mxu0 %v94
    %v1482 = vpop.f32.mrf.mxu0
    %v1483 = vadd.f32 %v301, %v1482
    %v1484 = vpop.f32.mrf.mxu0
    %1485 = vdwg.mxu0
    %1486 = vmatpush.bf16.msra.mxu0 %v957
    %1487 = vmatpush.bf16.msra.mxu0 %v953
    %1488 = vmatpush.bf16.msra.mxu0 %v949
    %1489 = vmatpush.bf16.msra.mxu0 %v945
    %1490 = vmatpush.bf16.msra.mxu0 %v941
    %1491 = vmatpush.bf16.msra.mxu0 %v937
    %1492 = vmatpush.bf16.msra.mxu0 %v933
    %1493 = vmatpush.bf16.msra.mxu0 %v929
    %1494 = vmatmul.bf16.gmra.mxu0 %v95
    %v1495 = vpop.f32.mrf.mxu0
    %v1496 = vadd.f32 %v1483, %v1495
    %v1497 = vpop.f32.mrf.mxu0
    %1498 = vdwg.mxu0
    %1499 = vmatpush.bf16.msra.mxu0 %v989
    %1500 = vmatpush.bf16.msra.mxu0 %v985
    %1501 = vmatpush.bf16.msra.mxu0 %v981
    %1502 = vmatpush.bf16.msra.mxu0 %v977
    %1503 = vmatpush.bf16.msra.mxu0 %v973
    %1504 = vmatpush.bf16.msra.mxu0 %v969
    %1505 = vmatpush.bf16.msra.mxu0 %v965
    %1506 = vmatpush.bf16.msra.mxu0 %v961
    %1507 = vmatmul.bf16.gmra.mxu0 %v96
    %v1508 = vpop.f32.mrf.mxu0
    %v1509 = vadd.f32 %v1496, %v1508
    %v1510 = vpop.f32.mrf.mxu0
    %1511 = vdwg.mxu0
    %1512 = vmatpush.bf16.msra.mxu0 %v1021
    %1513 = vmatpush.bf16.msra.mxu0 %v1017
    %1514 = vmatpush.bf16.msra.mxu0 %v1013
    %1515 = vmatpush.bf16.msra.mxu0 %v1009
    %1516 = vmatpush.bf16.msra.mxu0 %v1005
    %1517 = vmatpush.bf16.msra.mxu0 %v1001
    %1518 = vmatpush.bf16.msra.mxu0 %v997
    %1519 = vmatpush.bf16.msra.mxu0 %v993
    %1520 = vmatmul.bf16.gmra.mxu0 %v97
    %v1521 = vpop.f32.mrf.mxu0
    %v1522 = vadd.f32 %v1509, %v1521
    %v1523 = vpop.f32.mrf.mxu0
    %1524 = vdwg.mxu0
    %1525 = vmatpush.bf16.msra.mxu0 %v1053
    %1526 = vmatpush.bf16.msra.mxu0 %v1049
    %1527 = vmatpush.bf16.msra.mxu0 %v1045
    %1528 = vmatpush.bf16.msra.mxu0 %v1041
    %1529 = vmatpush.bf16.msra.mxu0 %v1037
    %1530 = vmatpush.bf16.msra.mxu0 %v1033
    %1531 = vmatpush.bf16.msra.mxu0 %v1029
    %1532 = vmatpush.bf16.msra.mxu0 %v1025
    %1533 = vmatmul.bf16.gmra.mxu0 %v98
    %v1534 = vpop.f32.mrf.mxu0
    %v1535 = vadd.f32 %v1522, %v1534
    %v1536 = vpop.f32.mrf.mxu0
    %1537 = vdwg.mxu0
    %1538 = vmatpush.bf16.msra.mxu0 %v1085
    %1539 = vmatpush.bf16.msra.mxu0 %v1081
    %1540 = vmatpush.bf16.msra.mxu0 %v1077
    %1541 = vmatpush.bf16.msra.mxu0 %v1073
    %1542 = vmatpush.bf16.msra.mxu0 %v1069
    %1543 = vmatpush.bf16.msra.mxu0 %v1065
    %1544 = vmatpush.bf16.msra.mxu0 %v1061
    %1545 = vmatpush.bf16.msra.mxu0 %v1057
    %1546 = vmatmul.bf16.gmra.mxu0 %v99
    %v1547 = vpop.f32.mrf.mxu0
    %v1548 = vadd.f32 %v1535, %v1547
    %v1549 = vpop.f32.mrf.mxu0
    %1550 = vdwg.mxu0
    %1551 = vmatpush.bf16.msra.mxu0 0
    %1552 = vmatpush.bf16.msra.mxu0 0
    %1553 = vmatpush.bf16.msra.mxu0 0
    %1554 = vmatpush.bf16.msra.mxu0 0
    %1555 = vmatpush.bf16.msra.mxu0 0
    %1556 = vmatpush.bf16.msra.mxu0 0
    %1557 = vmatpush.bf16.msra.mxu0 0
    %1558 = vmatpush.bf16.msra.mxu0 %v1089
    %1559 = vmatmul.bf16.gmra.mxu0 %v1289
    %v1560 = vpop.f32.mrf.mxu0
    %v1561 = vadd.f32 %v1548, %v1560
    %v1562 = vpop.f32.mrf.mxu0
    %1563 = vdwg.mxu0
    %1564 = vmatpush.bf16.msra.mxu0 %v926
    %1565 = vmatpush.bf16.msra.mxu0 %v922
    %1566 = vmatpush.bf16.msra.mxu0 %v918
    %1567 = vmatpush.bf16.msra.mxu0 %v914
    %1568 = vmatpush.bf16.msra.mxu0 %v910
    %1569 = vmatpush.bf16.msra.mxu0 %v906
    %1570 = vmatpush.bf16.msra.mxu0 %v902
    %1571 = vmatpush.bf16.msra.mxu0 %v898
    %1572 = vmatmul.bf16.gmra.mxu0 %v94
    %v1573 = vpop.f32.mrf.mxu0
    %v1574 = vadd.f32 %v302, %v1573
    %v1575 = vpop.f32.mrf.mxu0
    %1576 = vdwg.mxu0
    %1577 = vmatpush.bf16.msra.mxu0 %v958
    %1578 = vmatpush.bf16.msra.mxu0 %v954
    %1579 = vmatpush.bf16.msra.mxu0 %v950
    %1580 = vmatpush.bf16.msra.mxu0 %v946
    %1581 = vmatpush.bf16.msra.mxu0 %v942
    %1582 = vmatpush.bf16.msra.mxu0 %v938
    %1583 = vmatpush.bf16.msra.mxu0 %v934
    %1584 = vmatpush.bf16.msra.mxu0 %v930
    %1585 = vmatmul.bf16.gmra.mxu0 %v95
    %v1586 = vpop.f32.mrf.mxu0
    %v1587 = vadd.f32 %v1574, %v1586
    %v1588 = vpop.f32.mrf.mxu0
    %1589 = vdwg.mxu0
    %1590 = vmatpush.bf16.msra.mxu0 %v990
    %1591 = vmatpush.bf16.msra.mxu0 %v986
    %1592 = vmatpush.bf16.msra.mxu0 %v982
    %1593 = vmatpush.bf16.msra.mxu0 %v978
    %1594 = vmatpush.bf16.msra.mxu0 %v974
    %1595 = vmatpush.bf16.msra.mxu0 %v970
    %1596 = vmatpush.bf16.msra.mxu0 %v966
    %1597 = vmatpush.bf16.msra.mxu0 %v962
    %1598 = vmatmul.bf16.gmra.mxu0 %v96
    %v1599 = vpop.f32.mrf.mxu0
    %v1600 = vadd.f32 %v1587, %v1599
    %v1601 = vpop.f32.mrf.mxu0
    %1602 = vdwg.mxu0
    %1603 = vmatpush.bf16.msra.mxu0 %v1022
    %1604 = vmatpush.bf16.msra.mxu0 %v1018
    %1605 = vmatpush.bf16.msra.mxu0 %v1014
    %1606 = vmatpush.bf16.msra.mxu0 %v1010
    %1607 = vmatpush.bf16.msra.mxu0 %v1006
    %1608 = vmatpush.bf16.msra.mxu0 %v1002
    %1609 = vmatpush.bf16.msra.mxu0 %v998
    %1610 = vmatpush.bf16.msra.mxu0 %v994
    %1611 = vmatmul.bf16.gmra.mxu0 %v97
    %v1612 = vpop.f32.mrf.mxu0
    %v1613 = vadd.f32 %v1600, %v1612
    %v1614 = vpop.f32.mrf.mxu0
    %1615 = vdwg.mxu0
    %1616 = vmatpush.bf16.msra.mxu0 %v1054
    %1617 = vmatpush.bf16.msra.mxu0 %v1050
    %1618 = vmatpush.bf16.msra.mxu0 %v1046
    %1619 = vmatpush.bf16.msra.mxu0 %v1042
    %1620 = vmatpush.bf16.msra.mxu0 %v1038
    %1621 = vmatpush.bf16.msra.mxu0 %v1034
    %1622 = vmatpush.bf16.msra.mxu0 %v1030
    %1623 = vmatpush.bf16.msra.mxu0 %v1026
    %1624 = vmatmul.bf16.gmra.mxu0 %v98
    %v1625 = vpop.f32.mrf.mxu0
    %v1626 = vadd.f32 %v1613, %v1625
    %v1627 = vpop.f32.mrf.mxu0
    %1628 = vdwg.mxu0
    %1629 = vmatpush.bf16.msra.mxu0 %v1086
    %1630 = vmatpush.bf16.msra.mxu0 %v1082
    %1631 = vmatpush.bf16.msra.mxu0 %v1078
    %1632 = vmatpush.bf16.msra.mxu0 %v1074
    %1633 = vmatpush.bf16.msra.mxu0 %v1070
    %1634 = vmatpush.bf16.msra.mxu0 %v1066
    %1635 = vmatpush.bf16.msra.mxu0 %v1062
    %1636 = vmatpush.bf16.msra.mxu0 %v1058
    %1637 = vmatmul.bf16.gmra.mxu0 %v99
    %v1638 = vpop.f32.mrf.mxu0
    %v1639 = vadd.f32 %v1626, %v1638
    %v1640 = vpop.f32.mrf.mxu0
    %1641 = vdwg.mxu0
    %1642 = vmatpush.bf16.msra.mxu0 0
    %1643 = vmatpush.bf16.msra.mxu0 0
    %1644 = vmatpush.bf16.msra.mxu0 0
    %1645 = vmatpush.bf16.msra.mxu0 0
    %1646 = vmatpush.bf16.msra.mxu0 0
    %1647 = vmatpush.bf16.msra.mxu0 0
    %1648 = vmatpush.bf16.msra.mxu0 0
    %1649 = vmatpush.bf16.msra.mxu0 %v1090
    %1650 = vmatmul.bf16.gmra.mxu0 %v1289
    %v1651 = vpop.f32.mrf.mxu0
    %v1652 = vadd.f32 %v1639, %v1651
    %v1653 = vpop.f32.mrf.mxu0
    %1654 = vdwg.mxu0
    %vm1655 = vcmp.gt.f32.partialorder %v1379, 0.0
    %vm1656 = vcmp.gt.f32.partialorder %v1470, 0.0
    %vm1657 = vcmp.gt.f32.partialorder %v1561, 0.0
    %vm1658 = vcmp.gt.f32.partialorder %v1652, 0.0
    %v1659 = vmul.f32 %v1379, 0.2
    %v1660 = vmul.f32 %v1470, 0.2
    %v1661 = vmul.f32 %v1561, 0.2
    %v1662 = vmul.f32 %v1652, 0.2
    %v1663 = vsel %vm1655, %v1379, %v1659
    %v1664 = vsel %vm1656, %v1470, %v1660
    %v1665 = vsel %vm1657, %v1561, %v1661
    %v1666 = vsel %vm1658, %v1652, %v1662
    %v1667 = vpack.c.bf16 %v1663, %v1663
    %v1668 = vpack.c.bf16 %v1664, %v1664
    %v1669 = vpack.c.bf16 %v1665, %v1665
    %v1670 = vpack.c.bf16 %v1666, %v1666
    %v1671 = vld [vmem:[#allocation8] sm:$0xff]
    %v1672 = vld [vmem:[#allocation8 + $0x8] sm:$0xff]
    %v1673 = vld [vmem:[#allocation8 + $0x10] sm:$0xff]
    %v1674 = vld [vmem:[#allocation8 + $0x18] sm:$0xff]
    %v1675 = vld [vmem:[#allocation8 + $0x20] sm:$0xff]
    %v1676 = vld [vmem:[#allocation8 + $0x28] sm:$0xff]
    %v1677 = vld [vmem:[#allocation8 + $0x30] sm:$0xff]
    %v1678 = vld [vmem:[#allocation8 + $0x38] sm:$0xff]
    %v1679 = vld [vmem:[#allocation8 + $0x40] sm:$0xff]
    %v1680 = vld [vmem:[#allocation8 + $0x48] sm:$0xff]
    %v1681 = vld [vmem:[#allocation8 + $0x50] sm:$0xff]
    %v1682 = vld [vmem:[#allocation8 + $0x58] sm:$0xff]
    %v1683 = vld [vmem:[#allocation8 + $0x60] sm:$0xff]
    %v1684 = vld [vmem:[#allocation8 + $0x68] sm:$0xff]
    %v1685 = vld [vmem:[#allocation8 + $0x70] sm:$0xff]
    %v1686 = vld [vmem:[#allocation8 + $0x78] sm:$0xff]
    %v1687 = vld [vmem:[#allocation8 + $0x80] sm:$0xff]
    %v1688 = vld [vmem:[#allocation8 + $0x88] sm:$0xff]
    %v1689 = vld [vmem:[#allocation8 + $0x90] sm:$0xff]
    %v1690 = vld [vmem:[#allocation8 + $0x98] sm:$0xff]
    %v1691 = vld [vmem:[#allocation8 + $0xa0] sm:$0xff]
    %v1692 = vld [vmem:[#allocation8 + $0xa8] sm:$0xff]
    %v1693 = vld [vmem:[#allocation8 + $0xb0] sm:$0xff]
    %v1694 = vld [vmem:[#allocation8 + $0xb8] sm:$0xff]
    %v1695 = vld [vmem:[#allocation8 + $0xc0] sm:$0xff]
    %v1696 = vld [vmem:[#allocation8 + $0xc8] sm:$0xff]
    %v1697 = vld [vmem:[#allocation8 + $0xd0] sm:$0xff]
    %v1698 = vld [vmem:[#allocation8 + $0xd8] sm:$0xff]
    %v1699 = vld [vmem:[#allocation8 + $0xe0] sm:$0xff]
    %v1700 = vld [vmem:[#allocation8 + $0xe8] sm:$0xff]
    %v1701 = vld [vmem:[#allocation8 + $0xf0] sm:$0xff]
    %v1702 = vld [vmem:[#allocation8 + $0xf8] sm:$0xff]
    %v1703 = vld [vmem:[#allocation8 + $0x100] sm:$0xff]
    %v1704 = vld [vmem:[#allocation8 + $0x108] sm:$0xff]
    %v1705 = vld [vmem:[#allocation8 + $0x110] sm:$0xff]
    %v1706 = vld [vmem:[#allocation8 + $0x118] sm:$0xff]
    %v1707 = vld [vmem:[#allocation8 + $0x120] sm:$0xff]
    %v1708 = vld [vmem:[#allocation8 + $0x128] sm:$0xff]
    %v1709 = vld [vmem:[#allocation8 + $0x130] sm:$0xff]
    %v1710 = vld [vmem:[#allocation8 + $0x138] sm:$0xff]
    %v1711 = vld [vmem:[#allocation8 + $0x140] sm:$0xff]
    %v1712 = vld [vmem:[#allocation8 + $0x148] sm:$0xff]
    %v1713 = vld [vmem:[#allocation8 + $0x150] sm:$0xff]
    %v1714 = vld [vmem:[#allocation8 + $0x158] sm:$0xff]
    %v1715 = vld [vmem:[#allocation8 + $0x160] sm:$0xff]
    %v1716 = vld [vmem:[#allocation8 + $0x168] sm:$0xff]
    %v1717 = vld [vmem:[#allocation8 + $0x170] sm:$0xff]
    %v1718 = vld [vmem:[#allocation8 + $0x178] sm:$0xff]
    %v1719 = vld [vmem:[#allocation8 + $0x180] sm:$0xff]
    %v1720 = vld [vmem:[#allocation8 + $0x188] sm:$0xff]
    %v1721 = vld [vmem:[#allocation8 + $0x190] sm:$0xff]
    %v1722 = vld [vmem:[#allocation8 + $0x198] sm:$0xff]
    %v1723 = vld [vmem:[#allocation8 + $0x1a0] sm:$0xff]
    %v1724 = vld [vmem:[#allocation8 + $0x1a8] sm:$0xff]
    %v1725 = vld [vmem:[#allocation8 + $0x1b0] sm:$0xff]
    %v1726 = vld [vmem:[#allocation8 + $0x1b8] sm:$0xff]
    %v1727 = vld [vmem:[#allocation8 + $0x1c0] sm:$0xff]
    %v1728 = vld [vmem:[#allocation8 + $0x1c8] sm:$0xff]
    %v1729 = vld [vmem:[#allocation8 + $0x1d0] sm:$0xff]
    %v1730 = vld [vmem:[#allocation8 + $0x1d8] sm:$0xff]
    %v1731 = vld [vmem:[#allocation8 + $0x1e0] sm:$0xff]
    %v1732 = vld [vmem:[#allocation8 + $0x1e8] sm:$0xff]
    %v1733 = vld [vmem:[#allocation8 + $0x1f0] sm:$0xff]
    %v1734 = vld [vmem:[#allocation8 + $0x1f8] sm:$0xff]
    %v1735 = vld [vmem:[%s4] sm:$0x3]
    %v1737 = vperm.slane %v1735, 0
    %v1738 = vperm.slane %v1735, 1
    %v1805 = vunpack.c.l.b16 %v1671
    %v1806 = vunpack.c.h.b16 %v1671
    %v1807 = vunpack.c.l.b16 %v1672
    %v1808 = vunpack.c.h.b16 %v1672
    %v1809 = vunpack.c.l.b16 %v1673
    %v1810 = vunpack.c.h.b16 %v1673
    %v1811 = vunpack.c.l.b16 %v1674
    %v1812 = vunpack.c.h.b16 %v1674
    %v1813 = vunpack.c.l.b16 %v1675
    %v1814 = vunpack.c.h.b16 %v1675
    %v1815 = vunpack.c.l.b16 %v1676
    %v1816 = vunpack.c.h.b16 %v1676
    %v1817 = vunpack.c.l.b16 %v1677
    %v1818 = vunpack.c.h.b16 %v1677
    %v1819 = vunpack.c.l.b16 %v1678
    %v1820 = vunpack.c.h.b16 %v1678
    %v1821 = vunpack.c.l.b16 %v1679
    %v1822 = vunpack.c.h.b16 %v1679
    %v1823 = vunpack.c.l.b16 %v1680
    %v1824 = vunpack.c.h.b16 %v1680
    %v1825 = vunpack.c.l.b16 %v1681
    %v1826 = vunpack.c.h.b16 %v1681
    %v1827 = vunpack.c.l.b16 %v1682
    %v1828 = vunpack.c.h.b16 %v1682
    %v1829 = vunpack.c.l.b16 %v1683
    %v1830 = vunpack.c.h.b16 %v1683
    %v1831 = vunpack.c.l.b16 %v1684
    %v1832 = vunpack.c.h.b16 %v1684
    %v1833 = vunpack.c.l.b16 %v1685
    %v1834 = vunpack.c.h.b16 %v1685
    %v1835 = vunpack.c.l.b16 %v1686
    %v1836 = vunpack.c.h.b16 %v1686
    %v1837 = vunpack.c.l.b16 %v1687
    %v1838 = vunpack.c.h.b16 %v1687
    %v1839 = vunpack.c.l.b16 %v1688
    %v1840 = vunpack.c.h.b16 %v1688
    %v1841 = vunpack.c.l.b16 %v1689
    %v1842 = vunpack.c.h.b16 %v1689
    %v1843 = vunpack.c.l.b16 %v1690
    %v1844 = vunpack.c.h.b16 %v1690
    %v1845 = vunpack.c.l.b16 %v1691
    %v1846 = vunpack.c.h.b16 %v1691
    %v1847 = vunpack.c.l.b16 %v1692
    %v1848 = vunpack.c.h.b16 %v1692
    %v1849 = vunpack.c.l.b16 %v1693
    %v1850 = vunpack.c.h.b16 %v1693
    %v1851 = vunpack.c.l.b16 %v1694
    %v1852 = vunpack.c.h.b16 %v1694
    %v1853 = vunpack.c.l.b16 %v1695
    %v1854 = vunpack.c.h.b16 %v1695
    %v1855 = vunpack.c.l.b16 %v1696
    %v1856 = vunpack.c.h.b16 %v1696
    %v1857 = vunpack.c.l.b16 %v1697
    %v1858 = vunpack.c.h.b16 %v1697
    %v1859 = vunpack.c.l.b16 %v1698
    %v1860 = vunpack.c.h.b16 %v1698
    %v1861 = vunpack.c.l.b16 %v1699
    %v1862 = vunpack.c.h.b16 %v1699
    %v1863 = vunpack.c.l.b16 %v1700
    %v1864 = vunpack.c.h.b16 %v1700
    %v1865 = vunpack.c.l.b16 %v1701
    %v1866 = vunpack.c.h.b16 %v1701
    %v1867 = vunpack.c.l.b16 %v1702
    %v1868 = vunpack.c.h.b16 %v1702
    %v1869 = vunpack.c.l.b16 %v1703
    %v1870 = vunpack.c.h.b16 %v1703
    %v1871 = vunpack.c.l.b16 %v1704
    %v1872 = vunpack.c.h.b16 %v1704
    %v1873 = vunpack.c.l.b16 %v1705
    %v1874 = vunpack.c.h.b16 %v1705
    %v1875 = vunpack.c.l.b16 %v1706
    %v1876 = vunpack.c.h.b16 %v1706
    %v1877 = vunpack.c.l.b16 %v1707
    %v1878 = vunpack.c.h.b16 %v1707
    %v1879 = vunpack.c.l.b16 %v1708
    %v1880 = vunpack.c.h.b16 %v1708
    %v1881 = vunpack.c.l.b16 %v1709
    %v1882 = vunpack.c.h.b16 %v1709
    %v1883 = vunpack.c.l.b16 %v1710
    %v1884 = vunpack.c.h.b16 %v1710
    %v1885 = vunpack.c.l.b16 %v1711
    %v1886 = vunpack.c.h.b16 %v1711
    %v1887 = vunpack.c.l.b16 %v1712
    %v1888 = vunpack.c.h.b16 %v1712
    %v1889 = vunpack.c.l.b16 %v1713
    %v1890 = vunpack.c.h.b16 %v1713
    %v1891 = vunpack.c.l.b16 %v1714
    %v1892 = vunpack.c.h.b16 %v1714
    %v1893 = vunpack.c.l.b16 %v1715
    %v1894 = vunpack.c.h.b16 %v1715
    %v1895 = vunpack.c.l.b16 %v1716
    %v1896 = vunpack.c.h.b16 %v1716
    %v1897 = vunpack.c.l.b16 %v1717
    %v1898 = vunpack.c.h.b16 %v1717
    %v1899 = vunpack.c.l.b16 %v1718
    %v1900 = vunpack.c.h.b16 %v1718
    %v1901 = vunpack.c.l.b16 %v1719
    %v1902 = vunpack.c.h.b16 %v1719
    %v1903 = vunpack.c.l.b16 %v1720
    %v1904 = vunpack.c.h.b16 %v1720
    %v1905 = vunpack.c.l.b16 %v1721
    %v1906 = vunpack.c.h.b16 %v1721
    %v1907 = vunpack.c.l.b16 %v1722
    %v1908 = vunpack.c.h.b16 %v1722
    %v1909 = vunpack.c.l.b16 %v1723
    %v1910 = vunpack.c.h.b16 %v1723
    %v1911 = vunpack.c.l.b16 %v1724
    %v1912 = vunpack.c.h.b16 %v1724
    %v1913 = vunpack.c.l.b16 %v1725
    %v1914 = vunpack.c.h.b16 %v1725
    %v1915 = vunpack.c.l.b16 %v1726
    %v1916 = vunpack.c.h.b16 %v1726
    %v1917 = vunpack.c.l.b16 %v1727
    %v1918 = vunpack.c.h.b16 %v1727
    %v1919 = vunpack.c.l.b16 %v1728
    %v1920 = vunpack.c.h.b16 %v1728
    %v1921 = vunpack.c.l.b16 %v1729
    %v1922 = vunpack.c.h.b16 %v1729
    %v1923 = vunpack.c.l.b16 %v1730
    %v1924 = vunpack.c.h.b16 %v1730
    %v1925 = vunpack.c.l.b16 %v1731
    %v1926 = vunpack.c.h.b16 %v1731
    %v1927 = vunpack.c.l.b16 %v1732
    %v1928 = vunpack.c.h.b16 %v1732
    %v1929 = vunpack.c.l.b16 %v1733
    %v1930 = vunpack.c.h.b16 %v1733
    %v1931 = vunpack.c.l.b16 %v1734
    %v1932 = vunpack.c.h.b16 %v1734
    %v1933 = vpack.c.b16 %v1807, %v1805
    %v1934 = vpack.c.b16 %v1808, %v1806
    %v1935 = vpack.c.b16 %v1811, %v1809
    %v1936 = vpack.c.b16 %v1812, %v1810
    %v1937 = vpack.c.b16 %v1815, %v1813
    %v1938 = vpack.c.b16 %v1816, %v1814
    %v1939 = vpack.c.b16 %v1819, %v1817
    %v1940 = vpack.c.b16 %v1820, %v1818
    %v1941 = vpack.c.b16 %v1823, %v1821
    %v1942 = vpack.c.b16 %v1824, %v1822
    %v1943 = vpack.c.b16 %v1827, %v1825
    %v1944 = vpack.c.b16 %v1828, %v1826
    %v1945 = vpack.c.b16 %v1831, %v1829
    %v1946 = vpack.c.b16 %v1832, %v1830
    %v1947 = vpack.c.b16 %v1835, %v1833
    %v1948 = vpack.c.b16 %v1836, %v1834
    %v1949 = vpack.c.b16 %v1839, %v1837
    %v1950 = vpack.c.b16 %v1840, %v1838
    %v1951 = vpack.c.b16 %v1843, %v1841
    %v1952 = vpack.c.b16 %v1844, %v1842
    %v1953 = vpack.c.b16 %v1847, %v1845
    %v1954 = vpack.c.b16 %v1848, %v1846
    %v1955 = vpack.c.b16 %v1851, %v1849
    %v1956 = vpack.c.b16 %v1852, %v1850
    %v1957 = vpack.c.b16 %v1855, %v1853
    %v1958 = vpack.c.b16 %v1856, %v1854
    %v1959 = vpack.c.b16 %v1859, %v1857
    %v1960 = vpack.c.b16 %v1860, %v1858
    %v1961 = vpack.c.b16 %v1863, %v1861
    %v1962 = vpack.c.b16 %v1864, %v1862
    %v1963 = vpack.c.b16 %v1867, %v1865
    %v1964 = vpack.c.b16 %v1868, %v1866
    %v1965 = vpack.c.b16 %v1871, %v1869
    %v1966 = vpack.c.b16 %v1872, %v1870
    %v1967 = vpack.c.b16 %v1875, %v1873
    %v1968 = vpack.c.b16 %v1876, %v1874
    %v1969 = vpack.c.b16 %v1879, %v1877
    %v1970 = vpack.c.b16 %v1880, %v1878
    %v1971 = vpack.c.b16 %v1883, %v1881
    %v1972 = vpack.c.b16 %v1884, %v1882
    %v1973 = vpack.c.b16 %v1887, %v1885
    %v1974 = vpack.c.b16 %v1888, %v1886
    %v1975 = vpack.c.b16 %v1891, %v1889
    %v1976 = vpack.c.b16 %v1892, %v1890
    %v1977 = vpack.c.b16 %v1895, %v1893
    %v1978 = vpack.c.b16 %v1896, %v1894
    %v1979 = vpack.c.b16 %v1899, %v1897
    %v1980 = vpack.c.b16 %v1900, %v1898
    %v1981 = vpack.c.b16 %v1903, %v1901
    %v1982 = vpack.c.b16 %v1904, %v1902
    %v1983 = vpack.c.b16 %v1907, %v1905
    %v1984 = vpack.c.b16 %v1908, %v1906
    %v1985 = vpack.c.b16 %v1911, %v1909
    %v1986 = vpack.c.b16 %v1912, %v1910
    %v1987 = vpack.c.b16 %v1915, %v1913
    %v1988 = vpack.c.b16 %v1916, %v1914
    %v1989 = vpack.c.b16 %v1919, %v1917
    %v1990 = vpack.c.b16 %v1920, %v1918
    %v1991 = vpack.c.b16 %v1923, %v1921
    %v1992 = vpack.c.b16 %v1924, %v1922
    %v1993 = vpack.c.b16 %v1927, %v1925
    %v1994 = vpack.c.b16 %v1928, %v1926
    %v1995 = vpack.c.b16 %v1931, %v1929
    %v1996 = vpack.c.b16 %v1932, %v1930
    %2061 = vmatpush.bf16.msra.mxu0 %v1947
    %2062 = vmatpush.bf16.msra.mxu0 %v1945
    %2063 = vmatpush.bf16.msra.mxu0 %v1943
    %2064 = vmatpush.bf16.msra.mxu0 %v1941
    %2065 = vmatpush.bf16.msra.mxu0 %v1939
    %2066 = vmatpush.bf16.msra.mxu0 %v1937
    %2067 = vmatpush.bf16.msra.mxu0 %v1935
    %2068 = vmatpush.bf16.msra.mxu0 %v1933
    %2069 = vmatmul.bf16.gmra.mxu0 %v1667
    %v2070 = vpop.f32.mrf.mxu0
    %v2071 = vadd.f32 %v1737, %v2070
    %v2072 = vpop.f32.mrf.mxu0
    %2073 = vdwg.mxu0
    %2074 = vmatpush.bf16.msra.mxu0 %v1963
    %2075 = vmatpush.bf16.msra.mxu0 %v1961
    %2076 = vmatpush.bf16.msra.mxu0 %v1959
    %2077 = vmatpush.bf16.msra.mxu0 %v1957
    %2078 = vmatpush.bf16.msra.mxu0 %v1955
    %2079 = vmatpush.bf16.msra.mxu0 %v1953
    %2080 = vmatpush.bf16.msra.mxu0 %v1951
    %2081 = vmatpush.bf16.msra.mxu0 %v1949
    %2082 = vmatmul.bf16.gmra.mxu0 %v1668
    %v2083 = vpop.f32.mrf.mxu0
    %v2084 = vadd.f32 %v2071, %v2083
    %v2085 = vpop.f32.mrf.mxu0
    %2086 = vdwg.mxu0
    %2087 = vmatpush.bf16.msra.mxu0 %v1979
    %2088 = vmatpush.bf16.msra.mxu0 %v1977
    %2089 = vmatpush.bf16.msra.mxu0 %v1975
    %2090 = vmatpush.bf16.msra.mxu0 %v1973
    %2091 = vmatpush.bf16.msra.mxu0 %v1971
    %2092 = vmatpush.bf16.msra.mxu0 %v1969
    %2093 = vmatpush.bf16.msra.mxu0 %v1967
    %2094 = vmatpush.bf16.msra.mxu0 %v1965
    %2095 = vmatmul.bf16.gmra.mxu0 %v1669
    %v2096 = vpop.f32.mrf.mxu0
    %v2097 = vadd.f32 %v2084, %v2096
    %v2098 = vpop.f32.mrf.mxu0
    %2099 = vdwg.mxu0
    %2100 = vmatpush.bf16.msra.mxu0 %v1995
    %2101 = vmatpush.bf16.msra.mxu0 %v1993
    %2102 = vmatpush.bf16.msra.mxu0 %v1991
    %2103 = vmatpush.bf16.msra.mxu0 %v1989
    %2104 = vmatpush.bf16.msra.mxu0 %v1987
    %2105 = vmatpush.bf16.msra.mxu0 %v1985
    %2106 = vmatpush.bf16.msra.mxu0 %v1983
    %2107 = vmatpush.bf16.msra.mxu0 %v1981
    %2108 = vmatmul.bf16.gmra.mxu0 %v1670
    %v2109 = vpop.f32.mrf.mxu0
    %v2110 = vadd.f32 %v2097, %v2109
    %v2111 = vpop.f32.mrf.mxu0
    %2112 = vdwg.mxu0
    %2113 = vmatpush.bf16.msra.mxu0 %v1948
    %2114 = vmatpush.bf16.msra.mxu0 %v1946
    %2115 = vmatpush.bf16.msra.mxu0 %v1944
    %2116 = vmatpush.bf16.msra.mxu0 %v1942
    %2117 = vmatpush.bf16.msra.mxu0 %v1940
    %2118 = vmatpush.bf16.msra.mxu0 %v1938
    %2119 = vmatpush.bf16.msra.mxu0 %v1936
    %2120 = vmatpush.bf16.msra.mxu0 %v1934
    %2121 = vmatmul.bf16.gmra.mxu0 %v1667
    %v2122 = vpop.f32.mrf.mxu0
    %v2123 = vadd.f32 %v1738, %v2122
    %v2124 = vpop.f32.mrf.mxu0
    %2125 = vdwg.mxu0
    %2126 = vmatpush.bf16.msra.mxu0 %v1964
    %2127 = vmatpush.bf16.msra.mxu0 %v1962
    %2128 = vmatpush.bf16.msra.mxu0 %v1960
    %2129 = vmatpush.bf16.msra.mxu0 %v1958
    %2130 = vmatpush.bf16.msra.mxu0 %v1956
    %2131 = vmatpush.bf16.msra.mxu0 %v1954
    %2132 = vmatpush.bf16.msra.mxu0 %v1952
    %2133 = vmatpush.bf16.msra.mxu0 %v1950
    %2134 = vmatmul.bf16.gmra.mxu0 %v1668
    %v2135 = vpop.f32.mrf.mxu0
    %v2136 = vadd.f32 %v2123, %v2135
    %v2137 = vpop.f32.mrf.mxu0
    %2138 = vdwg.mxu0
    %2139 = vmatpush.bf16.msra.mxu0 %v1980
    %2140 = vmatpush.bf16.msra.mxu0 %v1978
    %2141 = vmatpush.bf16.msra.mxu0 %v1976
    %2142 = vmatpush.bf16.msra.mxu0 %v1974
    %2143 = vmatpush.bf16.msra.mxu0 %v1972
    %2144 = vmatpush.bf16.msra.mxu0 %v1970
    %2145 = vmatpush.bf16.msra.mxu0 %v1968
    %2146 = vmatpush.bf16.msra.mxu0 %v1966
    %2147 = vmatmul.bf16.gmra.mxu0 %v1669
    %v2148 = vpop.f32.mrf.mxu0
    %v2149 = vadd.f32 %v2136, %v2148
    %v2150 = vpop.f32.mrf.mxu0
    %2151 = vdwg.mxu0
    %2152 = vmatpush.bf16.msra.mxu0 %v1996
    %2153 = vmatpush.bf16.msra.mxu0 %v1994
    %2154 = vmatpush.bf16.msra.mxu0 %v1992
    %2155 = vmatpush.bf16.msra.mxu0 %v1990
    %2156 = vmatpush.bf16.msra.mxu0 %v1988
    %2157 = vmatpush.bf16.msra.mxu0 %v1986
    %2158 = vmatpush.bf16.msra.mxu0 %v1984
    %2159 = vmatpush.bf16.msra.mxu0 %v1982
    %2160 = vmatmul.bf16.gmra.mxu0 %v1670
    %v2161 = vpop.f32.mrf.mxu0
    %v2162 = vadd.f32 %v2149, %v2161
    %v2163 = vpop.f32.mrf.mxu0
    %2164 = vdwg.mxu0
    %vm2165 = vcmp.gt.f32.partialorder %v2110, 0.0
    %vm2166 = vcmp.gt.f32.partialorder %v2162, 0.0
    %v2167 = vmul.f32 %v2110, 0.2
    %v2168 = vmul.f32 %v2162, 0.2
    %v2169 = vsel %vm2165, %v2110, %v2167
    %v2170 = vsel %vm2166, %v2162, %v2168
    %v2171 = vld [vmem:[%s5] sm:$0x3]
    %v2173 = vperm.slane %v2171, 0
    %v2174 = vperm.slane %v2171, 1
    %v2177 = vmul.f32 %v2169, %v2173
    %v2178 = vmul.f32 %v2170, %v2174
    %v2179 = vadd.f32 %v2177, %v2178
    %2180 = vadd.xlane.f32.xlu0 %v2179
    %v2181 = vpop.xlane.xlu0 %2180
    %s2182 = sld [smem:[#allocation2]]
    %v2183 = vstv %s2182
    %v2184 = vadd.f32 %v2181, %v2183
    %v2185 = vxor.u32 %v2184, 2147483648
    %v2186 = vmul.f32 %v2185, 1.442695
    %v2187 = vpow.pop %v2186
    %v2188 = vadd.f32 %v2187, 1.0
    %v2189 = vrcp.pop %v2188
    %v2190 = vmul.f32 %v2188, %v2189
    %v2191 = vsub.f32 1.0, %v2190
    %v2192 = vmul.f32 %v2189, %v2191
    %v2193 = vadd.f32 %v2189, %v2192
    %vm2194 = vweird.f32 %v2188
    %vm2195 = vweird.f32 %v2189
    %vm2196 = vmor %vm2194, %vm2195
    %v2197 = vsel %vm2196, %v2189, %v2193
    %v2198 = vand.u32 2147483647, %v2188
    %vm2199 = vcmp.eq.f32.partialorder %v2198, 8.507059e+37
    %v2200 = vand.u32 %v2188, 2147483648
    %v2201 = vor.u32 1.1754944e-38, %v2200
    %v2202 = vsel %vm2199, %v2201, %v2197
    %v2203 = vmul.f32 1.0, %v2202
    %vm2204 = vcmask 7168
    %2205 = vst.msk [vmem:[%s7] sm:$0xff] %vm2204, %v2203
    // Predicated region
    $region46: #{tpu_custom_call.1} parent=1 // pred_check
      _
    $region47: #{tpu_custom_call.1} parent=1 // pred_check_branch
      %2207 = sbr.rel (0) target = $region49
    $region48: #{tpu_custom_call.1} parent=1 // pred_region
      _
    $region49: #{tpu_custom_call.1} parent=1 // pred_fallthru
      _
    // Predicated region
    $region50: #{tpu_custom_call.1} parent=1 // pred_check
      _
    $region51: #{tpu_custom_call.1} parent=1 // pred_check_branch
      %2209 = sbr.rel (0) target = $region53
    $region52: #{tpu_custom_call.1} parent=1 // pred_region
      _
    $region53: #{tpu_custom_call.1} parent=1 // pred_fallthru
      _
    %2210 = vsyncpa [#allocation4], 1
    %2211 = vsyncpa [#allocation6], 1
    %2212 = vsyncpa [#allocation9], 1

</llo_original>
